<compile_context>
chip_gen: v7x
topology: tpu7x:2x2x1
jax: 0.10.0
libtpu: 0.0.40
codegen_flags: <defaults>
</compile_context>

<pallas_src>
import jax
import jax.numpy as jnp
from jax.experimental import pallas as pl
from jax.experimental.pallas import tpu as pltpu

_LANE = 128       # lane-axis alignment (last dim)
_ROW_ALIGN = 16   # batch-tile row alignment (bf16 sublane pack)
_NEG_BIG = -1e30  # finite "masked logit" value (avoids -inf / NaN downstream)


def _round_up(n, m):
    return ((n + m - 1) // m) * m


def _cdiv(a, b):
    return (a + b - 1) // b


def _vmem_capacity_bytes():
    try:
        return int(pltpu.get_tpu_info().vmem_capacity_bytes)
    except Exception:
        return 64 << 20          # conservative (v7x-sized) default


def _splitnn_kernel(x_ref, w1_ref, b1_ref, w2_ref, b2_ref, out_ref):
    # ---- image_client: Linear + ReLU (cut-layer activation) ----
    # x arrives as raw f32; cast to bf16 right at the MXU boundary (VPU work
    # that hides under DMA/MXU slack), accumulate in f32.
    x = x_ref[...].astype(jnp.bfloat16)
    h = jnp.dot(x, w1_ref[...], preferred_element_type=jnp.float32)
    h = jnp.maximum(h + b1_ref[...], 0.0)                     # f32 bias + ReLU

    # ---- label_client: Linear + log_softmax ----
    # Padded class lanes carry a -1e30 bias (baked in at prepare time), so they
    # drop out of the softmax denominator with no in-kernel masking work.
    # TODO(synk): cut-layer h is fed to the MXU in bf16 (f32 accumulation);
    # exact f32 parity with the PyTorch module would need precision=HIGHEST.
    logits = jnp.dot(h.astype(jnp.bfloat16), w2_ref[...],
                     preferred_element_type=jnp.float32)
    logits = logits + b2_ref[...]                             # f32 bias (+mask)

    # numerically-stable log_softmax over the class axis (f32 throughout)
    m = jnp.max(logits, axis=-1, keepdims=True)
    z = logits - m
    lse = jnp.log(jnp.sum(jnp.exp(z), axis=-1, keepdims=True))
    out_ref[...] = (z - lse).astype(out_ref.dtype)


def prepare_splitnn_params(w1, b1, w2, b2):
    """One-time parameter prep (hoisted out of the per-call hot path):
    pad hidden/class dims to 128 lanes, cast weights to bf16, keep biases f32,
    and bake the class-padding mask into b2 (-1e30 on padded lanes)."""
    d_in, h_dim = w1.shape
    c_dim = w2.shape[1]
    h_p = _round_up(h_dim, _LANE)
    c_p = _round_up(c_dim, _LANE)

    w1p = jnp.zeros((d_in, h_p), jnp.bfloat16).at[:, :h_dim].set(
        w1.astype(jnp.bfloat16))
    b1p = jnp.zeros((1, h_p), jnp.float32).at[:, :h_dim].set(
        b1.reshape(1, -1).astype(jnp.float32))
    w2p = jnp.zeros((h_p, c_p), jnp.bfloat16).at[:h_dim, :c_dim].set(
        w2.astype(jnp.bfloat16))
    b2p = jnp.full((1, c_p), _NEG_BIG, jnp.float32).at[:, :c_dim].set(
        b2.reshape(1, -1).astype(jnp.float32))
    return (w1p, b1p, w2p, b2p), c_dim


def _per_row_vmem_bytes(d_in, h_p, c_p):
    # double-buffered f32 x tile + f32 out tile, plus the in-kernel f32 h slab,
    # bf16 h copy, f32 logits and softmax temporaries (z, exp(z)).
    return d_in * 4 * 2 + c_p * 4 * 2 + h_p * 4 + h_p * 2 + 3 * c_p * 4


def _choose_block_b(B, d_in, h_p, c_p, row_budget_bytes, block_cap):
    b_aligned = _round_up(B, _ROW_ALIGN)
    per_row = _per_row_vmem_bytes(d_in, h_p, c_p)
    bb_cap = max(_ROW_ALIGN, min(block_cap, row_budget_bytes // per_row))
    bb_cap = (bb_cap // _ROW_ALIGN) * _ROW_ALIGN
    # >= 2 grid steps when the batch allows (pipelines x/out DMA against compute
    # and lets v7x's 2 TensorCores shard the "parallel" axis); keep the step
    # count even so both TCs get equal work (harmless on 1-TC v5e/v6e).
    n_steps = _cdiv(b_aligned, bb_cap)
    if b_aligned >= 2 * _ROW_ALIGN:
        n_steps = max(2, n_steps)
    if n_steps > 1 and n_steps % 2 == 1:
        n_steps += 1
    return int(max(_ROW_ALIGN, _round_up(_cdiv(b_aligned, n_steps), _ROW_ALIGN)))


def splitnn_forward_prepared(x, params, n_classes, *, block_b=None):
    """Fused SplitNN forward on pre-padded params:
    log_softmax(relu(x @ w1 + b1) @ w2 + b2)."""
    w1p, b1p, w2p, b2p = params
    B, d_in = x.shape
    h_p = w1p.shape[1]
    c_p = w2p.shape[1]

    vmem_cap = _vmem_capacity_bytes()
    block_cap = 1024 if vmem_cap >= (100 << 20) else 512   # bigger tiles on 128 MiB parts
    budget = int(vmem_cap * 0.45)

    # Resident operand footprint (budget conservatively for 2 buffers even
    # though we request single buffering below).
    fixed = (w1p.size + w2p.size) * 2 * 2 + (h_p + c_p) * 4 * 2
    if fixed >= budget:
        # TODO(synk): for models whose bf16 weights approach ~20-25 MiB (v7x's
        # 64 MiB VMEM), tile the hidden dim with an "arbitrary" grid axis and an
        # f32 VMEM accumulator instead of keeping both weights fully resident.
        raise ValueError("SplitNN weights exceed the fully-resident VMEM plan")

    if block_b is None:
        block_b = _choose_block_b(B, d_in, h_p, c_p, budget - fixed, block_cap)
    block_b = max(_ROW_ALIGN, _round_up(int(block_b), _ROW_ALIGN))

    grid = (_cdiv(B, block_b),)    # no batch over-padding: partial last block OK

    est = fixed + _per_row_vmem_bytes(d_in, h_p, c_p) * block_b
    vmem_limit = int(min(max(est + (8 << 20), 32 << 20), vmem_cap - (4 << 20)))

    def build(resident_mode):
        resident_kw = {} if resident_mode is None else {"pipeline_mode": resident_mode}
        in_specs = [
            # x streamed as raw f32 (bf16 cast happens inside the kernel);
            # the last block dim equals the full array dim, so no 128 padding.
            pl.BlockSpec((block_b, d_in), lambda i: (i, 0)),
            pl.BlockSpec((d_in, h_p), lambda i: (0, 0), **resident_kw),   # w1
            pl.BlockSpec((1, h_p), lambda i: (0, 0), **resident_kw),      # b1
            pl.BlockSpec((h_p, c_p), lambda i: (0, 0), **resident_kw),    # w2
            pl.BlockSpec((1, c_p), lambda i: (0, 0), **resident_kw),      # b2
        ]
        return pl.pallas_call(
            _splitnn_kernel,
            out_shape=jax.ShapeDtypeStruct((B, c_p), jnp.float32),
            grid_spec=pltpu.PrefetchScalarGridSpec(
                num_scalar_prefetch=0,
                grid=grid,
                in_specs=in_specs,
                out_specs=pl.BlockSpec((block_b, c_p), lambda i: (i, 0)),
            ),
            compiler_params=pltpu.CompilerParams(
                dimension_semantics=("parallel",),
                vmem_limit_bytes=vmem_limit,
            ),
        )

    try:
        # Grid-invariant operands single-buffered: halves resident VMEM.
        out = build(pl.Buffered(1))(x, w1p, b1p, w2p, b2p)
    except Exception:
        # Installed Pallas rejects pipeline_mode / single buffering -> default.
        out = build(None)(x, w1p, b1p, w2p, b2p)

    # TODO(synk): with C << 128 the f32 (B, c_p) slab is mostly padding; a bf16
    # or compact-transposed output would cut write-back further if the consumer
    # tolerates it (review option (a)/(b)/(c)).
    return out[:, :n_classes]


def splitnn_forward(x, w1, b1, w2, b2, *, block_b=None):
    """Convenience wrapper: prep params then run (prefer prepare+_prepared for
    repeated calls so the padding/cast passes are paid once)."""
    params, c_dim = prepare_splitnn_params(w1, b1, w2, b2)
    return splitnn_forward_prepared(x, params, c_dim, block_b=block_b)


def reference_forward(x, w1, b1, w2, b2):
    # Mirrors the kernel's bf16-operand / f32-accumulation numerics.
    xb = x.astype(jnp.bfloat16)
    h = jnp.maximum(
        jnp.dot(xb, w1.astype(jnp.bfloat16), preferred_element_type=jnp.float32)
        + b1.reshape(1, -1).astype(jnp.float32), 0.0)
    logits = (jnp.dot(h.astype(jnp.bfloat16), w2.astype(jnp.bfloat16),
                      preferred_element_type=jnp.float32)
              + b2.reshape(1, -1).astype(jnp.float32))
    return jax.nn.log_softmax(logits, axis=-1)


if __name__ == "__main__":
    # Small, deterministic synthetic setup (no checkpoint loading). Shapes are
    # deliberately non-128-aligned to exercise padding/masking; B is large
    # enough for a multi-step (even) batch grid with a partial last block.
    B, D_IN, D_HIDDEN, D_OUT = 200, 96, 200, 10

    key = jax.random.PRNGKey(0)
    kx, kw1, kb1, kw2, kb2 = jax.random.split(key, 5)

    x = jax.random.normal(kx, (B, D_IN), dtype=jnp.float32)
    w1 = jax.random.normal(kw1, (D_IN, D_HIDDEN), dtype=jnp.float32) * 0.1
    b1 = jax.random.normal(kb1, (D_HIDDEN,), dtype=jnp.float32) * 0.1
    w2 = jax.random.normal(kw2, (D_HIDDEN, D_OUT), dtype=jnp.float32) * 0.1
    b2 = jax.random.normal(kb2, (D_OUT,), dtype=jnp.float32) * 0.1

    # One-time parameter prep (hoisted out of the per-call hot path), then run.
    params, n_classes = prepare_splitnn_params(w1, b1, w2, b2)
    params = jax.block_until_ready(params)

    out = splitnn_forward_prepared(x, params, n_classes)
    out = jax.block_until_ready(out)

    ref = reference_forward(x, w1, b1, w2, b2)
    assert out.shape == (B, D_OUT)
    assert bool(jnp.all(jnp.isfinite(out)))
    assert jnp.allclose(out, ref, atol=2e-3, rtol=2e-3)

    # TODO(synk): backward()/step()/zero_grads() are optimizer plumbing on the
    # two client submodules; only the forward hot path is implemented here.
    print("KERNEL_OK")
</pallas_src>

<mosaic_0001>
module attributes {stable_mosaic.version = 11 : i64} {
  func.func @_splitnn_kernel(%arg0: i32, %arg1: memref<112x96xf32, #tpu.memory_space<vmem>>, %arg2: memref<96x256xbf16, #tpu.memory_space<vmem>>, %arg3: memref<1x256xf32, #tpu.memory_space<vmem>>, %arg4: memref<256x128xbf16, #tpu.memory_space<vmem>>, %arg5: memref<1x128xf32, #tpu.memory_space<vmem>>, %arg6: memref<112x128xf32, #tpu.memory_space<vmem>>) attributes {dimension_semantics = [#tpu.dimension_semantics<parallel>], iteration_bounds = array<i64: 2>, scalar_prefetch = 0 : i64, scratch_operands = 0 : i64, tpu.core_type = #tpu.core_type<tc>, window_params = [{transform_indices = @transform_0, window_bounds = array<i64: 112, 96>}, {pipeline_mode = #tpu.pipeline_mode<synchronous>, transform_indices = @transform_1, window_bounds = array<i64: 96, 256>}, {pipeline_mode = #tpu.pipeline_mode<synchronous>, transform_indices = @transform_2, window_bounds = array<i64: 1, 256>}, {pipeline_mode = #tpu.pipeline_mode<synchronous>, transform_indices = @transform_3, window_bounds = array<i64: 256, 128>}, {pipeline_mode = #tpu.pipeline_mode<synchronous>, transform_indices = @transform_4, window_bounds = array<i64: 1, 128>}, {transform_indices = @transform_5, window_bounds = array<i64: 112, 128>}]} {
    %c0 = arith.constant 0 : index
    %c0_0 = arith.constant 0 : index
    %0 = vector.load %arg1[%c0, %c0_0] : memref<112x96xf32, #tpu.memory_space<vmem>>, vector<112x96xf32>
    %1 = arith.truncf %0 : vector<112x96xf32> to vector<112x96xbf16>
    %c0_1 = arith.constant 0 : index
    %c0_2 = arith.constant 0 : index
    %2 = vector.load %arg2[%c0_1, %c0_2] : memref<96x256xbf16, #tpu.memory_space<vmem>>, vector<96x256xbf16>
    %cst = arith.constant dense<0.000000e+00> : vector<112x256xf32>
    %3 = tpu.matmul %1, %2, %cst {dimension_numbers = #tpu.dot_dimension_numbers<[1], [0], [0], [1], [0, 0, 1, 1], [], []>} : vector<112x96xbf16>, vector<96x256xbf16>, vector<112x256xf32> -> vector<112x256xf32>
    %c0_3 = arith.constant 0 : index
    %c0_4 = arith.constant 0 : index
    %4 = vector.load %arg3[%c0_3, %c0_4] : memref<1x256xf32, #tpu.memory_space<vmem>>, vector<1x256xf32>
    %5 = vector.broadcast %4 : vector<1x256xf32> to vector<112x256xf32>
    %6 = arith.addf %3, %5 : vector<112x256xf32>
    %cst_5 = arith.constant 0.000000e+00 : f32
    %7 = vector.broadcast %cst_5 : f32 to vector<112x256xf32>
    %8 = arith.maximumf %6, %7 : vector<112x256xf32>
    %9 = arith.truncf %8 : vector<112x256xf32> to vector<112x256xbf16>
    %c0_6 = arith.constant 0 : index
    %c0_7 = arith.constant 0 : index
    %10 = vector.load %arg4[%c0_6, %c0_7] : memref<256x128xbf16, #tpu.memory_space<vmem>>, vector<256x128xbf16>
    %cst_8 = arith.constant dense<0.000000e+00> : vector<112x128xf32>
    %11 = tpu.matmul %9, %10, %cst_8 {dimension_numbers = #tpu.dot_dimension_numbers<[1], [0], [0], [1], [0, 0, 1, 1], [], []>} : vector<112x256xbf16>, vector<256x128xbf16>, vector<112x128xf32> -> vector<112x128xf32>
    %c0_9 = arith.constant 0 : index
    %c0_10 = arith.constant 0 : index
    %12 = vector.load %arg5[%c0_9, %c0_10] : memref<1x128xf32, #tpu.memory_space<vmem>>, vector<1x128xf32>
    %13 = vector.broadcast %12 : vector<1x128xf32> to vector<112x128xf32>
    %14 = arith.addf %11, %13 : vector<112x128xf32>
    %cst_11 = arith.constant dense<0xFF800000> : vector<112xf32>
    %15 = vector.multi_reduction <maximumf>, %14, %cst_11 [1] : vector<112x128xf32> to vector<112xf32>
    %16 = vector.shape_cast %15 : vector<112xf32> to vector<112x1xf32>
    %17 = vector.broadcast %16 : vector<112x1xf32> to vector<112x128xf32>
    %18 = arith.subf %14, %17 : vector<112x128xf32>
    %19 = math.exp %18 : vector<112x128xf32>
    %cst_12 = arith.constant dense<0.000000e+00> : vector<112xf32>
    %20 = vector.multi_reduction <add>, %19, %cst_12 [1] : vector<112x128xf32> to vector<112xf32>
    %21 = vector.shape_cast %20 : vector<112xf32> to vector<112x1xf32>
    %22 = math.log %21 : vector<112x1xf32>
    %23 = vector.broadcast %22 : vector<112x1xf32> to vector<112x128xf32>
    %24 = arith.subf %18, %23 : vector<112x128xf32>
    %c0_13 = arith.constant 0 : index
    %c0_14 = arith.constant 0 : index
    %25 = vector.load %arg6[%c0_13, %c0_14] : memref<112x128xf32, #tpu.memory_space<vmem>>, vector<112x128xf32>
    tpu.vector_store %arg6[%c0_13, %c0_14], %24 {strides = array<i32>} : memref<112x128xf32, #tpu.memory_space<vmem>>, vector<112x128xf32>,
    return
  }
  func.func @transform_0(%arg0: i32) -> (i32, i32) {
    %c0_i32 = arith.constant 0 : i32
    %c0_i32_0 = arith.constant 0 : i32
    return %arg0, %c0_i32 : i32, i32
  }
  func.func @transform_1(%arg0: i32) -> (i32, i32) {
    %c0_i32 = arith.constant 0 : i32
    %c0_i32_0 = arith.constant 0 : i32
    %c0_i32_1 = arith.constant 0 : i32
    return %c0_i32, %c0_i32_0 : i32, i32
  }
  func.func @transform_2(%arg0: i32) -> (i32, i32) {
    %c0_i32 = arith.constant 0 : i32
    %c0_i32_0 = arith.constant 0 : i32
    %c0_i32_1 = arith.constant 0 : i32
    return %c0_i32, %c0_i32_0 : i32, i32
  }
  func.func @transform_3(%arg0: i32) -> (i32, i32) {
    %c0_i32 = arith.constant 0 : i32
    %c0_i32_0 = arith.constant 0 : i32
    %c0_i32_1 = arith.constant 0 : i32
    return %c0_i32, %c0_i32_0 : i32, i32
  }
  func.func @transform_4(%arg0: i32) -> (i32, i32) {
    %c0_i32 = arith.constant 0 : i32
    %c0_i32_0 = arith.constant 0 : i32
    %c0_i32_1 = arith.constant 0 : i32
    return %c0_i32, %c0_i32_0 : i32, i32
  }
  func.func @transform_5(%arg0: i32) -> (i32, i32) {
    %c0_i32 = arith.constant 0 : i32
    %c0_i32_0 = arith.constant 0 : i32
    return %arg0, %c0_i32 : i32, i32
  }
}

module attributes {stable_mosaic.version = 11 : i64} {
  func.func @_splitnn_kernel(%arg0: i32, %arg1: memref<112x96xf32, #tpu.memory_space<vmem>>, %arg2: memref<96x256xbf16, #tpu.memory_space<vmem>>, %arg3: memref<1x256xf32, #tpu.memory_space<vmem>>, %arg4: memref<256x128xbf16, #tpu.memory_space<vmem>>, %arg5: memref<1x128xf32, #tpu.memory_space<vmem>>, %arg6: memref<112x128xf32, #tpu.memory_space<vmem>>) attributes {dimension_semantics = [#tpu.dimension_semantics<parallel>], iteration_bounds = array<i64: 2>, scalar_prefetch = 0 : i64, scratch_operands = 0 : i64, tpu.core_type = #tpu.core_type<tc>, window_params = [{transform_indices = @transform_0, window_bounds = array<i64: 112, 96>}, {pipeline_mode = #tpu.pipeline_mode<synchronous>, transform_indices = @transform_1, window_bounds = array<i64: 96, 256>}, {pipeline_mode = #tpu.pipeline_mode<synchronous>, transform_indices = @transform_2, window_bounds = array<i64: 1, 256>}, {pipeline_mode = #tpu.pipeline_mode<synchronous>, transform_indices = @transform_3, window_bounds = array<i64: 256, 128>}, {pipeline_mode = #tpu.pipeline_mode<synchronous>, transform_indices = @transform_4, window_bounds = array<i64: 1, 128>}, {transform_indices = @transform_5, window_bounds = array<i64: 112, 128>}]} {
    %c0 = arith.constant 0 : index
    %c0_0 = arith.constant 0 : index
    %0 = vector.load %arg1[%c0, %c0_0] : memref<112x96xf32, #tpu.memory_space<vmem>>, vector<112x96xf32>
    %1 = arith.truncf %0 : vector<112x96xf32> to vector<112x96xbf16>
    %c0_1 = arith.constant 0 : index
    %c0_2 = arith.constant 0 : index
    %2 = vector.load %arg2[%c0_1, %c0_2] : memref<96x256xbf16, #tpu.memory_space<vmem>>, vector<96x256xbf16>
    %cst = arith.constant dense<0.000000e+00> : vector<112x256xf32>
    %3 = tpu.matmul %1, %2, %cst {dimension_numbers = #tpu.dot_dimension_numbers<[1], [0], [0], [1], [0, 0, 1, 1], [], []>} : vector<112x96xbf16>, vector<96x256xbf16>, vector<112x256xf32> -> vector<112x256xf32>
    %c0_3 = arith.constant 0 : index
    %c0_4 = arith.constant 0 : index
    %4 = vector.load %arg3[%c0_3, %c0_4] : memref<1x256xf32, #tpu.memory_space<vmem>>, vector<1x256xf32>
    %5 = vector.broadcast %4 : vector<1x256xf32> to vector<112x256xf32>
    %6 = arith.addf %3, %5 : vector<112x256xf32>
    %cst_5 = arith.constant 0.000000e+00 : f32
    %7 = vector.broadcast %cst_5 : f32 to vector<112x256xf32>
    %8 = arith.maximumf %6, %7 : vector<112x256xf32>
    %9 = arith.truncf %8 : vector<112x256xf32> to vector<112x256xbf16>
    %c0_6 = arith.constant 0 : index
    %c0_7 = arith.constant 0 : index
    %10 = vector.load %arg4[%c0_6, %c0_7] : memref<256x128xbf16, #tpu.memory_space<vmem>>, vector<256x128xbf16>
    %cst_8 = arith.constant dense<0.000000e+00> : vector<112x128xf32>
    %11 = tpu.matmul %9, %10, %cst_8 {dimension_numbers = #tpu.dot_dimension_numbers<[1], [0], [0], [1], [0, 0, 1, 1], [], []>} : vector<112x256xbf16>, vector<256x128xbf16>, vector<112x128xf32> -> vector<112x128xf32>
    %c0_9 = arith.constant 0 : index
    %c0_10 = arith.constant 0 : index
    %12 = vector.load %arg5[%c0_9, %c0_10] : memref<1x128xf32, #tpu.memory_space<vmem>>, vector<1x128xf32>
    %13 = vector.broadcast %12 : vector<1x128xf32> to vector<112x128xf32>
    %14 = arith.addf %11, %13 : vector<112x128xf32>
    %cst_11 = arith.constant dense<0xFF800000> : vector<112xf32>
    %15 = vector.multi_reduction <maximumf>, %14, %cst_11 [1] : vector<112x128xf32> to vector<112xf32>
    %16 = vector.shape_cast %15 : vector<112xf32> to vector<112x1xf32>
    %17 = vector.broadcast %16 : vector<112x1xf32> to vector<112x128xf32>
    %18 = arith.subf %14, %17 : vector<112x128xf32>
    %19 = math.exp %18 : vector<112x128xf32>
    %cst_12 = arith.constant dense<0.000000e+00> : vector<112xf32>
    %20 = vector.multi_reduction <add>, %19, %cst_12 [1] : vector<112x128xf32> to vector<112xf32>
    %21 = vector.shape_cast %20 : vector<112xf32> to vector<112x1xf32>
    %22 = math.log %21 : vector<112x1xf32>
    %23 = vector.broadcast %22 : vector<112x1xf32> to vector<112x128xf32>
    %24 = arith.subf %18, %23 : vector<112x128xf32>
    %c0_13 = arith.constant 0 : index
    %c0_14 = arith.constant 0 : index
    %25 = vector.load %arg6[%c0_13, %c0_14] : memref<112x128xf32, #tpu.memory_space<vmem>>, vector<112x128xf32>
    tpu.vector_store %arg6[%c0_13, %c0_14], %24 {strides = array<i32>} : memref<112x128xf32, #tpu.memory_space<vmem>>, vector<112x128xf32>,
    return
  }
  func.func @transform_0(%arg0: i32) -> (i32, i32) {
    %c0_i32 = arith.constant 0 : i32
    %c0_i32_0 = arith.constant 0 : i32
    return %arg0, %c0_i32 : i32, i32
  }
  func.func @transform_1(%arg0: i32) -> (i32, i32) {
    %c0_i32 = arith.constant 0 : i32
    %c0_i32_0 = arith.constant 0 : i32
    %c0_i32_1 = arith.constant 0 : i32
    return %c0_i32, %c0_i32_0 : i32, i32
  }
  func.func @transform_2(%arg0: i32) -> (i32, i32) {
    %c0_i32 = arith.constant 0 : i32
    %c0_i32_0 = arith.constant 0 : i32
    %c0_i32_1 = arith.constant 0 : i32
    return %c0_i32, %c0_i32_0 : i32, i32
  }
  func.func @transform_3(%arg0: i32) -> (i32, i32) {
    %c0_i32 = arith.constant 0 : i32
    %c0_i32_0 = arith.constant 0 : i32
    %c0_i32_1 = arith.constant 0 : i32
    return %c0_i32, %c0_i32_0 : i32, i32
  }
  func.func @transform_4(%arg0: i32) -> (i32, i32) {
    %c0_i32 = arith.constant 0 : i32
    %c0_i32_0 = arith.constant 0 : i32
    %c0_i32_1 = arith.constant 0 : i32
    return %c0_i32, %c0_i32_0 : i32, i32
  }
  func.func @transform_5(%arg0: i32) -> (i32, i32) {
    %c0_i32 = arith.constant 0 : i32
    %c0_i32_0 = arith.constant 0 : i32
    return %arg0, %c0_i32 : i32, i32
  }
}

</mosaic_0001>

<llo_original>
// kernel: tpu_custom_call.1
$region0: #{tpu_custom_call.1}
  #allocation0 [shape = 'u32[]', space=smem, size = 0x4, offset = 0x4, fixed_abs, tag = 'smem constant byte address 0x4 - core index']
  #allocation1 [shape = 'u32[144,128]{1,0:T(1,128)}', space=vmem, size = 0x12000, scoped, tag = 'internal scratch']
  %s0 = inlined_call_operand.vmem [shape: f32[200,96], index: 0, kind: input, shape index: {}]
  %s1 = inlined_call_operand.vmem [shape: bf16[96,256], index: 1, kind: input, shape index: {}]
  %s2 = inlined_call_operand.vmem [shape: f32[1,256], index: 2, kind: input, shape index: {}]
  %s3 = inlined_call_operand.vmem [shape: bf16[256,128], index: 3, kind: input, shape index: {}]
  %s4 = inlined_call_operand.vmem [shape: f32[1,128], index: 4, kind: input, shape index: {}]
  %s5 = inlined_call_operand.hbm [shape: f32[200,128], index: 5, kind: output, shape index: {}]
  %s6 = sld [smem:[#allocation0]]
  $region53: #{tpu_custom_call.1} parent=0
    _
  %s8 = ssub.s32 1, %s6
  %s9 = scalar_select 0, %s8, %s6
  $region1: #{tpu_custom_call.1} parent=0
    #allocation2 [shape = 'u8[114688]{0}', space=vmem, size = 0x1c000, scoped, tag = 'output window, operand 0']
    #allocation3 [shape = 's32[2]{0}', space=sflag, size = 0x8, scoped, tag = 'scoped memory for tpu_custom_call.1']
    %10 = vsyncpa [#allocation3], 0
    %s11 = scalar_lea.sflag [#allocation3], 1
    %12 = vsyncpa %s11, 0
    loop: start=0, step=1, limit=4
    $region2: #{tpu_custom_call.1} parent=1 // loop_pre_header
      _
    $region3: #{tpu_custom_call.1} parent=1 // loop_header
      %s14 = sphi 0, %s18
      %p15 = scmp.ge.s32.totalorder %s14, 4
      %s24 = sphi 0, %s26
      %s27 = sphi 0, %s24
      %s28 = sphi 0, %s27
      %s44 = sphi 0, %s28
      %s48 = sphi 0, %s48
      %s50 = sphi 0, %s48
      %s51 = sphi 0, %s50
      %s65 = sphi 0, %s51
      %s69 = sphi 0, %s69
      %s71 = sphi 0, %s69
      %s72 = sphi 0, %s71
      %s86 = sphi 0, %s72
      %s90 = sphi 0, %s90
      %s92 = sphi 0, %s90
      %s93 = sphi 0, %s92
      %s107 = sphi 0, %s93
      %s111 = sphi 0, %s111
      %s113 = sphi 0, %s111
      %s114 = sphi 0, %s113
      %s128 = sphi 0, %s114
      %s134 = sphi 0, %s136
      %s137 = sphi 0, %s134
      %s138 = sphi 0, %s137
      %s154 = sphi 0, %s138
    $region4: #{tpu_custom_call.1} parent=1 // loop_header_branch
      %17 = sbr.rel (%p15) target = $region8
    $region5: #{tpu_custom_call.1} parent=1 // loop_body
      %s19 = ssub.s32 %s14, 1
      %s20 = ssub.s32 %s14, 2
      %s21 = sadd.s32 %s14, 1
      %s22 = ssub.s32 %s14, %s21
      %p23 = scmp.eq.s32.totalorder %s22, 0
      %s25 = sadd.s32 %s24, 1
      %s26 = scalar_select %p23, %s24, %s25
      %p29 = pneg %p23
      %p30 = scmp.eq.s32.totalorder %s14, 1
      %p31 = por %p29, %p30
      %p32 = scmp.ne.s32.totalorder %s24, %s27
      %p33 = scmp.eq.s32.totalorder %s14, 0
      %p34 = por %p32, %p33
      %p35 = scmp.ne.s32.totalorder %s24, %s27
      %p36 = scmp.eq.s32.totalorder %s19, 1
      %p37 = por %p35, %p36
      %p38 = scmp.ne.s32.totalorder %s27, %s28
      %p39 = scmp.eq.s32.totalorder %s19, 0
      %p40 = por %p38, %p39
      %p41 = scmp.ne.s32.totalorder %s27, %s28
      %p42 = scmp.eq.s32.totalorder %s20, 1
      %p43 = por %p41, %p42
      %p45 = scmp.ne.s32.totalorder %s28, %s44
      %p46 = scmp.eq.s32.totalorder %s20, 0
      %p47 = por %p45, %p46
      %s49 = sadd.s32 %s48, 1
      %p52 = scmp.eq.s32.totalorder %s14, 1
      %p53 = scmp.ne.s32.totalorder %s48, %s50
      %p54 = scmp.eq.s32.totalorder %s14, 0
      %p55 = por %p53, %p54
      %p56 = scmp.ne.s32.totalorder %s48, %s50
      %p57 = scmp.eq.s32.totalorder %s19, 1
      %p58 = por %p56, %p57
      %p59 = scmp.ne.s32.totalorder %s50, %s51
      %p60 = scmp.eq.s32.totalorder %s19, 0
      %p61 = por %p59, %p60
      %p62 = scmp.ne.s32.totalorder %s50, %s51
      %p63 = scmp.eq.s32.totalorder %s20, 1
      %p64 = por %p62, %p63
      %p66 = scmp.ne.s32.totalorder %s51, %s65
      %p67 = scmp.eq.s32.totalorder %s20, 0
      %p68 = por %p66, %p67
      %s70 = sadd.s32 %s69, 1
      %p73 = scmp.eq.s32.totalorder %s14, 1
      %p74 = scmp.ne.s32.totalorder %s69, %s71
      %p75 = scmp.eq.s32.totalorder %s14, 0
      %p76 = por %p74, %p75
      %p77 = scmp.ne.s32.totalorder %s69, %s71
      %p78 = scmp.eq.s32.totalorder %s19, 1
      %p79 = por %p77, %p78
      %p80 = scmp.ne.s32.totalorder %s71, %s72
      %p81 = scmp.eq.s32.totalorder %s19, 0
      %p82 = por %p80, %p81
      %p83 = scmp.ne.s32.totalorder %s71, %s72
      %p84 = scmp.eq.s32.totalorder %s20, 1
      %p85 = por %p83, %p84
      %p87 = scmp.ne.s32.totalorder %s72, %s86
      %p88 = scmp.eq.s32.totalorder %s20, 0
      %p89 = por %p87, %p88
      %s91 = sadd.s32 %s90, 1
      %p94 = scmp.eq.s32.totalorder %s14, 1
      %p95 = scmp.ne.s32.totalorder %s90, %s92
      %p96 = scmp.eq.s32.totalorder %s14, 0
      %p97 = por %p95, %p96
      %p98 = scmp.ne.s32.totalorder %s90, %s92
      %p99 = scmp.eq.s32.totalorder %s19, 1
      %p100 = por %p98, %p99
      %p101 = scmp.ne.s32.totalorder %s92, %s93
      %p102 = scmp.eq.s32.totalorder %s19, 0
      %p103 = por %p101, %p102
      %p104 = scmp.ne.s32.totalorder %s92, %s93
      %p105 = scmp.eq.s32.totalorder %s20, 1
      %p106 = por %p104, %p105
      %p108 = scmp.ne.s32.totalorder %s93, %s107
      %p109 = scmp.eq.s32.totalorder %s20, 0
      %p110 = por %p108, %p109
      %s112 = sadd.s32 %s111, 1
      %p115 = scmp.eq.s32.totalorder %s14, 1
      %p116 = scmp.ne.s32.totalorder %s111, %s113
      %p117 = scmp.eq.s32.totalorder %s14, 0
      %p118 = por %p116, %p117
      %p119 = scmp.ne.s32.totalorder %s111, %s113
      %p120 = scmp.eq.s32.totalorder %s19, 1
      %p121 = por %p119, %p120
      %p122 = scmp.ne.s32.totalorder %s113, %s114
      %p123 = scmp.eq.s32.totalorder %s19, 0
      %p124 = por %p122, %p123
      %p125 = scmp.ne.s32.totalorder %s113, %s114
      %p126 = scmp.eq.s32.totalorder %s20, 1
      %p127 = por %p125, %p126
      %p129 = scmp.ne.s32.totalorder %s114, %s128
      %p130 = scmp.eq.s32.totalorder %s20, 0
      %p131 = por %p129, %p130
      %s132 = ssub.s32 %s14, %s21
      %p133 = scmp.eq.s32.totalorder %s132, 0
      %s135 = sadd.s32 %s134, 1
      %s136 = scalar_select %p133, %s134, %s135
      %p139 = pneg %p133
      %p140 = scmp.eq.s32.totalorder %s14, 1
      %p141 = por %p139, %p140
      %p142 = scmp.ne.s32.totalorder %s134, %s137
      %p143 = scmp.eq.s32.totalorder %s14, 0
      %p144 = por %p142, %p143
      %p145 = scmp.ne.s32.totalorder %s134, %s137
      %p146 = scmp.eq.s32.totalorder %s19, 1
      %p147 = por %p145, %p146
      %p148 = scmp.ne.s32.totalorder %s137, %s138
      %p149 = scmp.eq.s32.totalorder %s19, 0
      %p150 = por %p148, %p149
      %p151 = scmp.ne.s32.totalorder %s137, %s138
      %p152 = scmp.eq.s32.totalorder %s20, 1
      %p153 = por %p151, %p152
      %p155 = scmp.ne.s32.totalorder %s138, %s154
      %p156 = scmp.eq.s32.totalorder %s20, 0
      %p157 = por %p155, %p156
      %p158 = scmp.le.s32.totalorder 1, %s14
      %p159 = scmp.lt.s32.totalorder %s14, 3
      %p160 = pnand %p158, %p159
      %p161 = pneg %p160
      // Predicated region
      $region9: #{tpu_custom_call.1} parent=5 // pred_check
        _
      $region10: #{tpu_custom_call.1} parent=5 // pred_check_branch
        %163 = sbr.rel (%p160) target = $region12
      $region11: #{tpu_custom_call.1} parent=5 // pred_region
        %s164 = ssub.s32 %s14, 1
        // Predicated region
        $region13: #{tpu_custom_call.1} parent=11 // pred_check
          %p165 = pneg %p61
        $region14: #{tpu_custom_call.1} parent=11 // pred_check_branch
          %167 = sbr.rel (%p165) target = $region16
        $region15: #{tpu_custom_call.1} parent=11 // pred_region
          _
        $region16: #{tpu_custom_call.1} parent=11 // pred_fallthru
          _
        // Predicated region
        $region17: #{tpu_custom_call.1} parent=11 // pred_check
          %p168 = pneg %p82
        $region18: #{tpu_custom_call.1} parent=11 // pred_check_branch
          %170 = sbr.rel (%p168) target = $region20
        $region19: #{tpu_custom_call.1} parent=11 // pred_region
          _
        $region20: #{tpu_custom_call.1} parent=11 // pred_fallthru
          _
        // Predicated region
        $region21: #{tpu_custom_call.1} parent=11 // pred_check
          %p171 = pneg %p103
        $region22: #{tpu_custom_call.1} parent=11 // pred_check_branch
          %173 = sbr.rel (%p171) target = $region24
        $region23: #{tpu_custom_call.1} parent=11 // pred_region
          _
        $region24: #{tpu_custom_call.1} parent=11 // pred_fallthru
          _
        // Predicated region
        $region25: #{tpu_custom_call.1} parent=11 // pred_check
          %p174 = pneg %p124
        $region26: #{tpu_custom_call.1} parent=11 // pred_check_branch
          %176 = sbr.rel (%p174) target = $region28
        $region27: #{tpu_custom_call.1} parent=11 // pred_region
          _
        $region28: #{tpu_custom_call.1} parent=11 // pred_fallthru
          _
      $region12: #{tpu_custom_call.1} parent=5 // pred_fallthru
        _
      %p177 = scmp.lt.s32.totalorder %s14, 2
      // Predicated region
      $region29: #{tpu_custom_call.1} parent=5 // pred_check
        %p178 = pneg %p177
      $region30: #{tpu_custom_call.1} parent=5 // pred_check_branch
        %180 = sbr.rel (%p178) target = $region32
      $region31: #{tpu_custom_call.1} parent=5 // pred_region
        // Predicated region
        $region33: #{tpu_custom_call.1} parent=31 // pred_check
          %p181 = pneg %p34
        $region34: #{tpu_custom_call.1} parent=31 // pred_check_branch
          %183 = sbr.rel (%p181) target = $region36
        $region35: #{tpu_custom_call.1} parent=31 // pred_region
          %s184 = smul.u32 14, %s14
          %s185 = ssub.s32 25, %s184
          %p186 = scmp.lt.s32.totalorder %s185, 14
          %s187 = scalar_select %p186, %s185, 14
          %s188 = smul.u32 128, %s187
          %p189 = scmp.lt.s32.totalorder %s184, 24
          %s190 = scalar_select %p189, %s184, 24
          %s191 = smul.addr %s190, 8
          %s192 = scalar_lea.vmem %s0, %s191
          %s193 = smul.u32 14, %s14
          %s194 = ssub.s32 25, %s193
          %p195 = scmp.lt.s32.totalorder %s194, 14
          %s196 = scalar_select %p195, %s194, 14
          %s197 = smul.u32 128, %s196
        $region36: #{tpu_custom_call.1} parent=31 // pred_fallthru
          _
      $region32: #{tpu_custom_call.1} parent=5 // pred_fallthru
        _
      %p198 = scmp.le.s32.totalorder 1, %s14
      %p199 = scmp.lt.s32.totalorder %s14, 3
      %p200 = pnand %p198, %p199
      %p201 = pneg %p200
      // Predicated region
      $region37: #{tpu_custom_call.1} parent=5 // pred_check
        _
      $region38: #{tpu_custom_call.1} parent=5 // pred_check_branch
        %203 = sbr.rel (%p200) target = $region40
      $region39: #{tpu_custom_call.1} parent=5 // pred_region
        %s204 = ssub.s32 %s14, 1
        %s205 = smul.u32 14, %s19
        %s206 = ssub.s32 25, %s205
        %p207 = scmp.lt.s32.totalorder %s206, 14
        %s208 = scalar_select %p207, %s206, 14
        %s209 = smul.u32 128, %s208
        %p210 = scmp.lt.s32.totalorder %s205, 24
        %s211 = scalar_select %p210, %s205, 24
        %s212 = smul.addr %s211, 8
        %s213 = scalar_lea.vmem %s0, %s212
        %p214 = pneg %p40
        %p215 = pneg %p37
        %p216 = pneg %p61
        %p217 = pneg %p58
        %p218 = pneg %p82
        %p219 = pneg %p79
        %p220 = pneg %p103
        %p221 = pneg %p100
        %p222 = pneg %p124
        %p223 = pneg %p121
        %p224 = pneg %p150
        %p225 = pneg %p147
        %s226 = sand.u32 %s137, 1
        %s227 = scalar_lea.sflag [#allocation3], %s226
        %s228 = sand.u32 %s137, 1
        %s229 = smul.addr %s228, 112
        %s230 = scalar_lea.vmem [#allocation2], %s229
        %s231 = smul.u32 14, %s19
        %s232 = ssub.s32 25, %s231
        %p233 = scmp.lt.s32.totalorder %s232, 14
        %s234 = scalar_select %p233, %s232, 14
        %s235 = smul.u32 128, %s234
        %p236 = scmp.lt.s32.totalorder %s231, 24
        %s237 = scalar_select %p236, %s231, 24
        %s238 = smul.addr %s237, 8
        %s239 = scalar_lea.vmem %s0, %s238
        %s240 = smul.u32 14, %s19
        %s241 = ssub.s32 25, %s240
        %p242 = scmp.lt.s32.totalorder %s241, 14
        %s243 = scalar_select %p242, %s241, 14
        %s244 = smul.u32 128, %s243
        %s245 = smul.u32 14, %s19
        %s246 = ssub.s32 25, %s245
        %p247 = scmp.lt.s32.totalorder %s246, 14
        %s248 = scalar_select %p247, %s246, 14
        %s249 = smul.u32 128, %s248
        %v251 = vld [vmem:[%s239] sm:$0xff]
        %v252 = vld [vmem:[%s239 + $0x8] sm:$0xff]
        %v253 = vld [vmem:[%s239 + $0x10] sm:$0xff]
        %v254 = vld [vmem:[%s239 + $0x18] sm:$0xff]
        %v255 = vld [vmem:[%s239 + $0x20] sm:$0xff]
        %v256 = vld [vmem:[%s239 + $0x28] sm:$0xff]
        %v257 = vld [vmem:[%s239 + $0x30] sm:$0xff]
        %v258 = vld [vmem:[%s239 + $0x38] sm:$0xff]
        %v259 = vld [vmem:[%s239 + $0x40] sm:$0xff]
        %v260 = vld [vmem:[%s239 + $0x48] sm:$0xff]
        %v261 = vld [vmem:[%s239 + $0x50] sm:$0xff]
        %v262 = vld [vmem:[%s239 + $0x58] sm:$0xff]
        %v263 = vld [vmem:[%s239 + $0x60] sm:$0xff]
        %v264 = vld [vmem:[%s239 + $0x68] sm:$0xff]
        %v265 = vpack.c.bf16 %v252, %v251
        %v266 = vpack.c.bf16 %v254, %v253
        %v267 = vpack.c.bf16 %v256, %v255
        %v268 = vpack.c.bf16 %v258, %v257
        %v269 = vpack.c.bf16 %v260, %v259
        %v270 = vpack.c.bf16 %v262, %v261
        %v271 = vpack.c.bf16 %v264, %v263
        %v272 = vld [vmem:[%s1] sm:$0xff]
        %v273 = vld [vmem:[%s1 + $0x8] sm:$0xff]
        %v274 = vld [vmem:[%s1 + $0x10] sm:$0xff]
        %v275 = vld [vmem:[%s1 + $0x18] sm:$0xff]
        %v276 = vld [vmem:[%s1 + $0x20] sm:$0xff]
        %v277 = vld [vmem:[%s1 + $0x28] sm:$0xff]
        %v278 = vld [vmem:[%s1 + $0x30] sm:$0xff]
        %v279 = vld [vmem:[%s1 + $0x38] sm:$0xff]
        %v280 = vld [vmem:[%s1 + $0x40] sm:$0xff]
        %v281 = vld [vmem:[%s1 + $0x48] sm:$0xff]
        %v282 = vld [vmem:[%s1 + $0x50] sm:$0xff]
        %v283 = vld [vmem:[%s1 + $0x58] sm:$0xff]
        %v284 = vld [vmem:[%s2] sm:$0x3]
        %v286 = vlaneseq
        %v287 = vshrl.u32 %v286, 7
        %v288 = vsub.s32 0, %v287
        %v289 = vrot.slane %v284, %v288
        %v290 = vlaneseq
        %v291 = vshrl.u32 %v290, 7
        %v292 = vsub.s32 1, %v291
        %v293 = vrot.slane %v284, %v292
        %v308 = vunpack.c.l.b16 %v272
        %v309 = vunpack.c.h.b16 %v272
        %v310 = vunpack.c.l.b16 %v273
        %v311 = vunpack.c.h.b16 %v273
        %v312 = vunpack.c.l.b16 %v274
        %v313 = vunpack.c.h.b16 %v274
        %v314 = vunpack.c.l.b16 %v275
        %v315 = vunpack.c.h.b16 %v275
        %v316 = vunpack.c.l.b16 %v276
        %v317 = vunpack.c.h.b16 %v276
        %v318 = vunpack.c.l.b16 %v277
        %v319 = vunpack.c.h.b16 %v277
        %v320 = vunpack.c.l.b16 %v278
        %v321 = vunpack.c.h.b16 %v278
        %v322 = vunpack.c.l.b16 %v279
        %v323 = vunpack.c.h.b16 %v279
        %v324 = vunpack.c.l.b16 %v280
        %v325 = vunpack.c.h.b16 %v280
        %v326 = vunpack.c.l.b16 %v281
        %v327 = vunpack.c.h.b16 %v281
        %v328 = vunpack.c.l.b16 %v282
        %v329 = vunpack.c.h.b16 %v282
        %v330 = vunpack.c.l.b16 %v283
        %v331 = vunpack.c.h.b16 %v283
        %v332 = vpack.c.b16 %v310, %v308
        %v333 = vpack.c.b16 %v311, %v309
        %v334 = vpack.c.b16 %v314, %v312
        %v335 = vpack.c.b16 %v315, %v313
        %v336 = vpack.c.b16 %v318, %v316
        %v337 = vpack.c.b16 %v319, %v317
        %v338 = vpack.c.b16 %v322, %v320
        %v339 = vpack.c.b16 %v323, %v321
        %v340 = vpack.c.b16 %v326, %v324
        %v341 = vpack.c.b16 %v327, %v325
        %v342 = vpack.c.b16 %v330, %v328
        %v343 = vpack.c.b16 %v331, %v329
        %vm356 = vcmask 785408
        %v358 = vsel %vm356, %v265, 0
        %v361 = vsel %vm356, %v266, 0
        %v364 = vsel %vm356, %v267, 0
        %v367 = vsel %vm356, %v268, 0
        %v370 = vsel %vm356, %v269, 0
        %v373 = vsel %vm356, %v270, 0
        %v376 = vsel %vm356, %v271, 0
        %378 = vmatprep.subr.bf16.mxu0 %v333
        %379 = vmatpush1.bf16.msra.mxu0 %v332
        %380 = vmatprep.subr.bf16.mxu0 %v335
        %381 = vmatpush1.bf16.msra.mxu0 %v334
        %382 = vmatprep.subr.bf16.mxu0 %v337
        %383 = vmatpush1.bf16.msra.mxu0 %v336
        %384 = vmatprep.subr.bf16.mxu0 %v339
        %385 = vmatpush1.bf16.msra.mxu0 %v338
        %386 = vmatprep.subr.bf16.mxu0 %v341
        %387 = vmatpush1.bf16.msra.mxu0 %v340
        %388 = vmatprep.subr.bf16.mxu0 %v343
        %389 = vmatpush1.bf16.msra.mxu0 %v342
        %390 = vmatprep.subr.bf16.mxu0 0
        %391 = vmatpush1.bf16.msra.mxu0 0
        %392 = vmatprep.subr.bf16.mxu0 0
        %393 = vmatpush1.bf16.msra.mxu0 0
        %394 = vmatprep.subr.bf16.mxu0 0
        %395 = vmatpush1.bf16.msra.mxu0 0
        %396 = vmatprep.subr.bf16.mxu0 0
        %397 = vmatpush1.bf16.msra.mxu0 0
        %398 = vmatprep.subr.bf16.mxu0 0
        %399 = vmatpush1.bf16.msra.mxu0 0
        %400 = vmatprep.subr.bf16.mxu0 0
        %401 = vmatpush1.bf16.msra.mxu0 0
        %402 = vmatprep.subr.bf16.mxu0 0
        %403 = vmatpush1.bf16.msra.mxu0 0
        %404 = vmatprep.subr.bf16.mxu0 0
        %405 = vmatpush1.bf16.msra.mxu0 0
        %406 = vmatprep.subr.bf16.mxu0 0
        %407 = vmatpush1.bf16.msra.mxu0 0
        %408 = vmatprep.subr.bf16.mxu0 0
        %409 = vmatpush1.bf16.msra.mxu0 0
        %410 = vmatprep.mubr.bf16.mxu0 0
        %411 = vmatmul.mubr.bf16.gmra.mrb[0].mxu0 %v358
        %v412 = vpop.f32.mrb[0].mxu0
        %v413 = vadd.f32 %v289, %v412
        %v414 = vpop.f32.mrb[0].mxu0
        %v415 = vadd.f32 %v293, %v414
        %v416 = vpop.f32.mrb[0].mxu0
        %v417 = vadd.f32 %v289, %v416
        %v418 = vpop.f32.mrb[0].mxu0
        %v419 = vadd.f32 %v293, %v418
        %420 = vmatprep.mubr.bf16.mxu0 0
        %421 = vmatmul.mubr.bf16.gmra.mrb[0].mxu0 %v361
        %v422 = vpop.f32.mrb[0].mxu0
        %v423 = vadd.f32 %v289, %v422
        %v424 = vpop.f32.mrb[0].mxu0
        %v425 = vadd.f32 %v293, %v424
        %v426 = vpop.f32.mrb[0].mxu0
        %v427 = vadd.f32 %v289, %v426
        %v428 = vpop.f32.mrb[0].mxu0
        %v429 = vadd.f32 %v293, %v428
        %430 = vmatprep.mubr.bf16.mxu0 0
        %431 = vmatmul.mubr.bf16.gmra.mrb[0].mxu0 %v364
        %v432 = vpop.f32.mrb[0].mxu0
        %v433 = vadd.f32 %v289, %v432
        %v434 = vpop.f32.mrb[0].mxu0
        %v435 = vadd.f32 %v293, %v434
        %v436 = vpop.f32.mrb[0].mxu0
        %v437 = vadd.f32 %v289, %v436
        %v438 = vpop.f32.mrb[0].mxu0
        %v439 = vadd.f32 %v293, %v438
        %440 = vmatprep.mubr.bf16.mxu0 0
        %441 = vmatmul.mubr.bf16.gmra.mrb[0].mxu0 %v367
        %v442 = vpop.f32.mrb[0].mxu0
        %v443 = vadd.f32 %v289, %v442
        %v444 = vpop.f32.mrb[0].mxu0
        %v445 = vadd.f32 %v293, %v444
        %v446 = vpop.f32.mrb[0].mxu0
        %v447 = vadd.f32 %v289, %v446
        %v448 = vpop.f32.mrb[0].mxu0
        %v449 = vadd.f32 %v293, %v448
        %450 = vmatprep.mubr.bf16.mxu0 0
        %451 = vmatmul.mubr.bf16.gmra.mrb[0].mxu0 %v370
        %v452 = vpop.f32.mrb[0].mxu0
        %v453 = vadd.f32 %v289, %v452
        %v454 = vpop.f32.mrb[0].mxu0
        %v455 = vadd.f32 %v293, %v454
        %v456 = vpop.f32.mrb[0].mxu0
        %v457 = vadd.f32 %v289, %v456
        %v458 = vpop.f32.mrb[0].mxu0
        %v459 = vadd.f32 %v293, %v458
        %460 = vmatprep.mubr.bf16.mxu0 0
        %461 = vmatmul.mubr.bf16.gmra.mrb[0].mxu0 %v373
        %v462 = vpop.f32.mrb[0].mxu0
        %v463 = vadd.f32 %v289, %v462
        %v464 = vpop.f32.mrb[0].mxu0
        %v465 = vadd.f32 %v293, %v464
        %v466 = vpop.f32.mrb[0].mxu0
        %v467 = vadd.f32 %v289, %v466
        %v468 = vpop.f32.mrb[0].mxu0
        %v469 = vadd.f32 %v293, %v468
        %470 = vmatprep.mubr.bf16.mxu0 0
        %471 = vmatmul.mubr.bf16.gmra.mrb[0].mxu0 %v376
        %v472 = vpop.f32.mrb[0].mxu0
        %v473 = vadd.f32 %v289, %v472
        %v474 = vpop.f32.mrb[0].mxu0
        %v475 = vadd.f32 %v293, %v474
        %v476 = vpop.f32.mrb[0].mxu0
        %v477 = vadd.f32 %v289, %v476
        %v478 = vpop.f32.mrb[0].mxu0
        %v479 = vadd.f32 %v293, %v478
        %480 = vdwg.mxu0
        %v481 = vmax.f32 %v413, 0.0
        %v482 = vmax.f32 %v415, 0.0
        %v483 = vmax.f32 %v417, 0.0
        %v484 = vmax.f32 %v419, 0.0
        %v485 = vmax.f32 %v423, 0.0
        %v486 = vmax.f32 %v425, 0.0
        %v487 = vmax.f32 %v427, 0.0
        %v488 = vmax.f32 %v429, 0.0
        %v489 = vmax.f32 %v433, 0.0
        %v490 = vmax.f32 %v435, 0.0
        %v491 = vmax.f32 %v437, 0.0
        %v492 = vmax.f32 %v439, 0.0
        %v493 = vmax.f32 %v443, 0.0
        %v494 = vmax.f32 %v445, 0.0
        %v495 = vmax.f32 %v447, 0.0
        %v496 = vmax.f32 %v449, 0.0
        %v497 = vmax.f32 %v453, 0.0
        %v498 = vmax.f32 %v455, 0.0
        %v499 = vmax.f32 %v457, 0.0
        %v500 = vmax.f32 %v459, 0.0
        %v501 = vmax.f32 %v463, 0.0
        %v502 = vmax.f32 %v465, 0.0
        %v503 = vmax.f32 %v467, 0.0
        %v504 = vmax.f32 %v469, 0.0
        %v505 = vmax.f32 %v473, 0.0
        %v506 = vmax.f32 %v475, 0.0
        %v507 = vmax.f32 %v477, 0.0
        %v508 = vmax.f32 %v479, 0.0
        %v509 = vpack.c.bf16 %v483, %v481
        %v510 = vpack.c.bf16 %v484, %v482
        %v511 = vpack.c.bf16 %v487, %v485
        %v512 = vpack.c.bf16 %v488, %v486
        %v513 = vpack.c.bf16 %v491, %v489
        %v514 = vpack.c.bf16 %v492, %v490
        %v515 = vpack.c.bf16 %v495, %v493
        %v516 = vpack.c.bf16 %v496, %v494
        %v517 = vpack.c.bf16 %v499, %v497
        %v518 = vpack.c.bf16 %v500, %v498
        %v519 = vpack.c.bf16 %v503, %v501
        %v520 = vpack.c.bf16 %v504, %v502
        %v521 = vpack.c.bf16 %v507, %v505
        %v522 = vpack.c.bf16 %v508, %v506
        %v523 = vld [vmem:[%s3] sm:$0xf]
        %v524 = vld [vmem:[%s3 + $0x4] sm:$0xf]
        %v525 = vld [vmem:[%s3 + $0x8] sm:$0xf]
        %v526 = vld [vmem:[%s3 + $0xc] sm:$0xf]
        %v527 = vld [vmem:[%s3 + $0x10] sm:$0xf]
        %v528 = vld [vmem:[%s3 + $0x14] sm:$0xf]
        %v529 = vld [vmem:[%s3 + $0x18] sm:$0xf]
        %v530 = vld [vmem:[%s3 + $0x1c] sm:$0xf]
        %v531 = vld [vmem:[%s3 + $0x20] sm:$0xf]
        %v532 = vld [vmem:[%s3 + $0x24] sm:$0xf]
        %v533 = vld [vmem:[%s3 + $0x28] sm:$0xf]
        %v534 = vld [vmem:[%s3 + $0x2c] sm:$0xf]
        %v535 = vld [vmem:[%s3 + $0x30] sm:$0xf]
        %v536 = vld [vmem:[%s3 + $0x34] sm:$0xf]
        %v537 = vld [vmem:[%s3 + $0x38] sm:$0xf]
        %v538 = vld [vmem:[%s3 + $0x3c] sm:$0xf]
        %v539 = vld [vmem:[%s3 + $0x40] sm:$0xf]
        %v540 = vld [vmem:[%s3 + $0x44] sm:$0xf]
        %v541 = vld [vmem:[%s3 + $0x48] sm:$0xf]
        %v542 = vld [vmem:[%s3 + $0x4c] sm:$0xf]
        %v543 = vld [vmem:[%s3 + $0x50] sm:$0xf]
        %v544 = vld [vmem:[%s3 + $0x54] sm:$0xf]
        %v545 = vld [vmem:[%s3 + $0x58] sm:$0xf]
        %v546 = vld [vmem:[%s3 + $0x5c] sm:$0xf]
        %v547 = vld [vmem:[%s3 + $0x60] sm:$0xf]
        %v548 = vld [vmem:[%s3 + $0x64] sm:$0xf]
        %v549 = vld [vmem:[%s3 + $0x68] sm:$0xf]
        %v550 = vld [vmem:[%s3 + $0x6c] sm:$0xf]
        %v551 = vld [vmem:[%s3 + $0x70] sm:$0xf]
        %v552 = vld [vmem:[%s3 + $0x74] sm:$0xf]
        %v553 = vld [vmem:[%s3 + $0x78] sm:$0xf]
        %v554 = vld [vmem:[%s3 + $0x7c] sm:$0xf]
        %v555 = vld [vmem:[%s4] sm:$0x1]
        %v557 = vlaneseq
        %v558 = vshrl.u32 %v557, 7
        %v559 = vsub.s32 0, %v558
        %v560 = vrot.slane %v555, %v559
        %v594 = vunpack.c.l.b16 %v523
        %v595 = vunpack.c.l.b16 %v524
        %v596 = vunpack.c.l.b16 %v525
        %v597 = vunpack.c.l.b16 %v526
        %v598 = vunpack.c.l.b16 %v527
        %v599 = vunpack.c.l.b16 %v528
        %v600 = vunpack.c.l.b16 %v529
        %v601 = vunpack.c.l.b16 %v530
        %v602 = vunpack.c.l.b16 %v531
        %v603 = vunpack.c.l.b16 %v532
        %v604 = vunpack.c.l.b16 %v533
        %v605 = vunpack.c.l.b16 %v534
        %v606 = vunpack.c.l.b16 %v535
        %v607 = vunpack.c.l.b16 %v536
        %v608 = vunpack.c.l.b16 %v537
        %v609 = vunpack.c.l.b16 %v538
        %v610 = vunpack.c.l.b16 %v539
        %v611 = vunpack.c.l.b16 %v540
        %v612 = vunpack.c.l.b16 %v541
        %v613 = vunpack.c.l.b16 %v542
        %v614 = vunpack.c.l.b16 %v543
        %v615 = vunpack.c.l.b16 %v544
        %v616 = vunpack.c.l.b16 %v545
        %v617 = vunpack.c.l.b16 %v546
        %v618 = vunpack.c.l.b16 %v547
        %v619 = vunpack.c.l.b16 %v548
        %v620 = vunpack.c.l.b16 %v549
        %v621 = vunpack.c.l.b16 %v550
        %v622 = vunpack.c.l.b16 %v551
        %v623 = vunpack.c.l.b16 %v552
        %v624 = vunpack.c.l.b16 %v553
        %v625 = vunpack.c.l.b16 %v554
        %v626 = vpack.c.b16 %v595, %v594
        %v627 = vpack.c.b16 %v597, %v596
        %v628 = vpack.c.b16 %v599, %v598
        %v629 = vpack.c.b16 %v601, %v600
        %v630 = vpack.c.b16 %v603, %v602
        %v631 = vpack.c.b16 %v605, %v604
        %v632 = vpack.c.b16 %v607, %v606
        %v633 = vpack.c.b16 %v609, %v608
        %v634 = vpack.c.b16 %v611, %v610
        %v635 = vpack.c.b16 %v613, %v612
        %v636 = vpack.c.b16 %v615, %v614
        %v637 = vpack.c.b16 %v617, %v616
        %v638 = vpack.c.b16 %v619, %v618
        %v639 = vpack.c.b16 %v621, %v620
        %v640 = vpack.c.b16 %v623, %v622
        %v641 = vpack.c.b16 %v625, %v624
        %658 = vmatprep.subr.bf16.mxu0 0
        %659 = vmatpush1.bf16.msra.mxu0 %v626
        %660 = vmatprep.subr.bf16.mxu0 0
        %661 = vmatpush1.bf16.msra.mxu0 %v627
        %662 = vmatprep.subr.bf16.mxu0 0
        %663 = vmatpush1.bf16.msra.mxu0 %v628
        %664 = vmatprep.subr.bf16.mxu0 0
        %665 = vmatpush1.bf16.msra.mxu0 %v629
        %666 = vmatprep.subr.bf16.mxu0 0
        %667 = vmatpush1.bf16.msra.mxu0 %v630
        %668 = vmatprep.subr.bf16.mxu0 0
        %669 = vmatpush1.bf16.msra.mxu0 %v631
        %670 = vmatprep.subr.bf16.mxu0 0
        %671 = vmatpush1.bf16.msra.mxu0 %v632
        %672 = vmatprep.subr.bf16.mxu0 0
        %673 = vmatpush1.bf16.msra.mxu0 %v633
        %674 = vmatprep.subr.bf16.mxu0 0
        %675 = vmatpush1.bf16.msra.mxu0 %v634
        %676 = vmatprep.subr.bf16.mxu0 0
        %677 = vmatpush1.bf16.msra.mxu0 %v635
        %678 = vmatprep.subr.bf16.mxu0 0
        %679 = vmatpush1.bf16.msra.mxu0 %v636
        %680 = vmatprep.subr.bf16.mxu0 0
        %681 = vmatpush1.bf16.msra.mxu0 %v637
        %682 = vmatprep.subr.bf16.mxu0 0
        %683 = vmatpush1.bf16.msra.mxu0 %v638
        %684 = vmatprep.subr.bf16.mxu0 0
        %685 = vmatpush1.bf16.msra.mxu0 %v639
        %686 = vmatprep.subr.bf16.mxu0 0
        %687 = vmatpush1.bf16.msra.mxu0 %v640
        %688 = vmatprep.subr.bf16.mxu0 0
        %689 = vmatpush1.bf16.msra.mxu0 %v641
        %690 = vmatprep.mubr.bf16.mxu0 %v510
        %691 = vmatmul.mubr.bf16.gmra.mrb[0].mxu0 %v509
        %v692 = vpop.f32.mrb[0].mxu0
        %v693 = vadd.f32 %v560, %v692
        %v694 = vpop.f32.mrb[0].mxu0
        %v695 = vpop.f32.mrb[0].mxu0
        %v696 = vadd.f32 %v560, %v695
        %v697 = vpop.f32.mrb[0].mxu0
        %698 = vmatprep.mubr.bf16.mxu0 %v512
        %699 = vmatmul.mubr.bf16.gmra.mrb[0].mxu0 %v511
        %v700 = vpop.f32.mrb[0].mxu0
        %v701 = vadd.f32 %v560, %v700
        %v702 = vpop.f32.mrb[0].mxu0
        %v703 = vpop.f32.mrb[0].mxu0
        %v704 = vadd.f32 %v560, %v703
        %v705 = vpop.f32.mrb[0].mxu0
        %706 = vmatprep.mubr.bf16.mxu0 %v514
        %707 = vmatmul.mubr.bf16.gmra.mrb[0].mxu0 %v513
        %v708 = vpop.f32.mrb[0].mxu0
        %v709 = vadd.f32 %v560, %v708
        %v710 = vpop.f32.mrb[0].mxu0
        %v711 = vpop.f32.mrb[0].mxu0
        %v712 = vadd.f32 %v560, %v711
        %v713 = vpop.f32.mrb[0].mxu0
        %714 = vmatprep.mubr.bf16.mxu0 %v516
        %715 = vmatmul.mubr.bf16.gmra.mrb[0].mxu0 %v515
        %v716 = vpop.f32.mrb[0].mxu0
        %v717 = vadd.f32 %v560, %v716
        %v718 = vpop.f32.mrb[0].mxu0
        %v719 = vpop.f32.mrb[0].mxu0
        %v720 = vadd.f32 %v560, %v719
        %v721 = vpop.f32.mrb[0].mxu0
        %722 = vmatprep.mubr.bf16.mxu0 %v518
        %723 = vmatmul.mubr.bf16.gmra.mrb[0].mxu0 %v517
        %v724 = vpop.f32.mrb[0].mxu0
        %v725 = vadd.f32 %v560, %v724
        %v726 = vpop.f32.mrb[0].mxu0
        %v727 = vpop.f32.mrb[0].mxu0
        %v728 = vadd.f32 %v560, %v727
        %v729 = vpop.f32.mrb[0].mxu0
        %730 = vmatprep.mubr.bf16.mxu0 %v520
        %731 = vmatmul.mubr.bf16.gmra.mrb[0].mxu0 %v519
        %v732 = vpop.f32.mrb[0].mxu0
        %v733 = vadd.f32 %v560, %v732
        %v734 = vpop.f32.mrb[0].mxu0
        %v735 = vpop.f32.mrb[0].mxu0
        %v736 = vadd.f32 %v560, %v735
        %v737 = vpop.f32.mrb[0].mxu0
        %738 = vmatprep.mubr.bf16.mxu0 %v522
        %739 = vmatmul.mubr.bf16.gmra.mrb[0].mxu0 %v521
        %v740 = vpop.f32.mrb[0].mxu0
        %v741 = vadd.f32 %v560, %v740
        %v742 = vpop.f32.mrb[0].mxu0
        %v743 = vpop.f32.mrb[0].mxu0
        %v744 = vadd.f32 %v560, %v743
        %v745 = vpop.f32.mrb[0].mxu0
        %746 = vdwg.mxu0
        %747 = vmax.xlane.f32.xlu0 %v693
        %v748 = vpop.xlane.xlu0 %747
        %749 = vmax.xlane.f32.xlu0 %v696
        %v750 = vpop.xlane.xlu0 %749
        %751 = vmax.xlane.f32.xlu0 %v701
        %v752 = vpop.xlane.xlu0 %751
        %753 = vmax.xlane.f32.xlu0 %v704
        %v754 = vpop.xlane.xlu0 %753
        %755 = vmax.xlane.f32.xlu0 %v709
        %v756 = vpop.xlane.xlu0 %755
        %757 = vmax.xlane.f32.xlu0 %v712
        %v758 = vpop.xlane.xlu0 %757
        %759 = vmax.xlane.f32.xlu0 %v717
        %v760 = vpop.xlane.xlu0 %759
        %761 = vmax.xlane.f32.xlu0 %v720
        %v762 = vpop.xlane.xlu0 %761
        %763 = vmax.xlane.f32.xlu0 %v725
        %v764 = vpop.xlane.xlu0 %763
        %765 = vmax.xlane.f32.xlu0 %v728
        %v766 = vpop.xlane.xlu0 %765
        %767 = vmax.xlane.f32.xlu0 %v733
        %v768 = vpop.xlane.xlu0 %767
        %769 = vmax.xlane.f32.xlu0 %v736
        %v770 = vpop.xlane.xlu0 %769
        %771 = vmax.xlane.f32.xlu0 %v741
        %v772 = vpop.xlane.xlu0 %771
        %773 = vmax.xlane.f32.xlu0 %v744
        %v774 = vpop.xlane.xlu0 %773
        %v775 = vsub.f32 %v693, %v748
        %v776 = vsub.f32 %v696, %v750
        %v777 = vsub.f32 %v701, %v752
        %v778 = vsub.f32 %v704, %v754
        %v779 = vsub.f32 %v709, %v756
        %v780 = vsub.f32 %v712, %v758
        %v781 = vsub.f32 %v717, %v760
        %v782 = vsub.f32 %v720, %v762
        %v783 = vsub.f32 %v725, %v764
        %v784 = vsub.f32 %v728, %v766
        %v785 = vsub.f32 %v733, %v768
        %v786 = vsub.f32 %v736, %v770
        %v787 = vsub.f32 %v741, %v772
        %v788 = vsub.f32 %v744, %v774
        %v789 = vmul.f32 %v775, 1.442695
        %v790 = vpow.pop %v789
        %v791 = vmul.f32 %v776, 1.442695
        %v792 = vpow.pop %v791
        %v793 = vmul.f32 %v777, 1.442695
        %v794 = vpow.pop %v793
        %v795 = vmul.f32 %v778, 1.442695
        %v796 = vpow.pop %v795
        %v797 = vmul.f32 %v779, 1.442695
        %v798 = vpow.pop %v797
        %v799 = vmul.f32 %v780, 1.442695
        %v800 = vpow.pop %v799
        %v801 = vmul.f32 %v781, 1.442695
        %v802 = vpow.pop %v801
        %v803 = vmul.f32 %v782, 1.442695
        %v804 = vpow.pop %v803
        %v805 = vmul.f32 %v783, 1.442695
        %v806 = vpow.pop %v805
        %v807 = vmul.f32 %v784, 1.442695
        %v808 = vpow.pop %v807
        %v809 = vmul.f32 %v785, 1.442695
        %v810 = vpow.pop %v809
        %v811 = vmul.f32 %v786, 1.442695
        %v812 = vpow.pop %v811
        %v813 = vmul.f32 %v787, 1.442695
        %v814 = vpow.pop %v813
        %v815 = vmul.f32 %v788, 1.442695
        %v816 = vpow.pop %v815
        %817 = vadd.xlane.f32.xlu0 %v790
        %v818 = vpop.xlane.xlu0 %817
        %819 = vadd.xlane.f32.xlu0 %v792
        %v820 = vpop.xlane.xlu0 %819
        %821 = vadd.xlane.f32.xlu0 %v794
        %v822 = vpop.xlane.xlu0 %821
        %823 = vadd.xlane.f32.xlu0 %v796
        %v824 = vpop.xlane.xlu0 %823
        %825 = vadd.xlane.f32.xlu0 %v798
        %v826 = vpop.xlane.xlu0 %825
        %827 = vadd.xlane.f32.xlu0 %v800
        %v828 = vpop.xlane.xlu0 %827
        %829 = vadd.xlane.f32.xlu0 %v802
        %v830 = vpop.xlane.xlu0 %829
        %831 = vadd.xlane.f32.xlu0 %v804
        %v832 = vpop.xlane.xlu0 %831
        %833 = vadd.xlane.f32.xlu0 %v806
        %v834 = vpop.xlane.xlu0 %833
        %835 = vadd.xlane.f32.xlu0 %v808
        %v836 = vpop.xlane.xlu0 %835
        %837 = vadd.xlane.f32.xlu0 %v810
        %v838 = vpop.xlane.xlu0 %837
        %839 = vadd.xlane.f32.xlu0 %v812
        %v840 = vpop.xlane.xlu0 %839
        %841 = vadd.xlane.f32.xlu0 %v814
        %v842 = vpop.xlane.xlu0 %841
        %843 = vadd.xlane.f32.xlu0 %v816
        %v844 = vpop.xlane.xlu0 %843
        %v845 = vlog2.pop %v818
        %v846 = vmul.f32 %v845, 0.6931472
        %v847 = vlog2.pop %v820
        %v848 = vmul.f32 %v847, 0.6931472
        %v849 = vlog2.pop %v822
        %v850 = vmul.f32 %v849, 0.6931472
        %v851 = vlog2.pop %v824
        %v852 = vmul.f32 %v851, 0.6931472
        %v853 = vlog2.pop %v826
        %v854 = vmul.f32 %v853, 0.6931472
        %v855 = vlog2.pop %v828
        %v856 = vmul.f32 %v855, 0.6931472
        %v857 = vlog2.pop %v830
        %v858 = vmul.f32 %v857, 0.6931472
        %v859 = vlog2.pop %v832
        %v860 = vmul.f32 %v859, 0.6931472
        %v861 = vlog2.pop %v834
        %v862 = vmul.f32 %v861, 0.6931472
        %v863 = vlog2.pop %v836
        %v864 = vmul.f32 %v863, 0.6931472
        %v865 = vlog2.pop %v838
        %v866 = vmul.f32 %v865, 0.6931472
        %v867 = vlog2.pop %v840
        %v868 = vmul.f32 %v867, 0.6931472
        %v869 = vlog2.pop %v842
        %v870 = vmul.f32 %v869, 0.6931472
        %v871 = vlog2.pop %v844
        %v872 = vmul.f32 %v871, 0.6931472
        %v873 = vsub.f32 %v775, %v846
        %v874 = vsub.f32 %v776, %v848
        %v875 = vsub.f32 %v777, %v850
        %v876 = vsub.f32 %v778, %v852
        %v877 = vsub.f32 %v779, %v854
        %v878 = vsub.f32 %v780, %v856
        %v879 = vsub.f32 %v781, %v858
        %v880 = vsub.f32 %v782, %v860
        %v881 = vsub.f32 %v783, %v862
        %v882 = vsub.f32 %v784, %v864
        %v883 = vsub.f32 %v785, %v866
        %v884 = vsub.f32 %v786, %v868
        %v885 = vsub.f32 %v787, %v870
        %v886 = vsub.f32 %v788, %v872
        %887 = vst [vmem:[%s230] sm:$0xff] %v873
        %888 = vst [vmem:[%s230 + $0x8] sm:$0xff] %v874
        %889 = vst [vmem:[%s230 + $0x10] sm:$0xff] %v875
        %890 = vst [vmem:[%s230 + $0x18] sm:$0xff] %v876
        %891 = vst [vmem:[%s230 + $0x20] sm:$0xff] %v877
        %892 = vst [vmem:[%s230 + $0x28] sm:$0xff] %v878
        %893 = vst [vmem:[%s230 + $0x30] sm:$0xff] %v879
        %894 = vst [vmem:[%s230 + $0x38] sm:$0xff] %v880
        %895 = vst [vmem:[%s230 + $0x40] sm:$0xff] %v881
        %896 = vst [vmem:[%s230 + $0x48] sm:$0xff] %v882
        %897 = vst [vmem:[%s230 + $0x50] sm:$0xff] %v883
        %898 = vst [vmem:[%s230 + $0x58] sm:$0xff] %v884
        %899 = vst [vmem:[%s230 + $0x60] sm:$0xff] %v885
        %900 = vst [vmem:[%s230 + $0x68] sm:$0xff] %v886
        %s901 = sand.u32 %s137, 1
        %s902 = scalar_lea.sflag [#allocation3], %s901
        %s903 = sand.u32 %s137, 1
        %s904 = smul.addr %s903, 112
        %s905 = scalar_lea.vmem [#allocation2], %s904
        // Predicated region
        $region41: #{tpu_custom_call.1} parent=39 // pred_check
          %p906 = pneg %p147
        $region42: #{tpu_custom_call.1} parent=39 // pred_check_branch
          %908 = sbr.rel (%p906) target = $region44
        $region43: #{tpu_custom_call.1} parent=39 // pred_region
          %s909 = smul.u32 14, %s19
          %s910 = ssub.s32 25, %s909
          %p911 = scmp.lt.s32.totalorder %s910, 14
          %s912 = scalar_select %p911, %s910, 14
          %s913 = smul.u32 128, %s912
          %s915 = ssub.s32 1792, %s913
          %916 = vsyncadd %s902, %s915
          %p917 = scmp.ne.s32.totalorder 0, %s913
          %s918 = smul.addr %s909, 128
          %s919 = scalar_lea.hbm %s5, %s918
          %s920 = smul.u32 8, %s912
          %s921 = sshll.u32 %s905, 4
          %s922 = int_to_ptr.vmem [resolvable:$true] %s921
          %s923 = sshll.u32 %s920, 4
          %927 = dma.vmem_to_hbm [thread:$0]  (%p917), %s922, %s923, %s919, %s902, 128, 128, 8
        $region44: #{tpu_custom_call.1} parent=39 // pred_fallthru
          _
      $region40: #{tpu_custom_call.1} parent=5 // pred_fallthru
        _
      %p928 = scmp.le.s32.totalorder 2, %s14
      // Predicated region
      $region45: #{tpu_custom_call.1} parent=5 // pred_check
        %p929 = pneg %p928
      $region46: #{tpu_custom_call.1} parent=5 // pred_check_branch
        %931 = sbr.rel (%p929) target = $region48
      $region47: #{tpu_custom_call.1} parent=5 // pred_region
        %s932 = ssub.s32 %s14, 2
        // Predicated region
        $region49: #{tpu_custom_call.1} parent=47 // pred_check
          %p933 = pneg %p153
        $region50: #{tpu_custom_call.1} parent=47 // pred_check_branch
          %935 = sbr.rel (%p933) target = $region52
        $region51: #{tpu_custom_call.1} parent=47 // pred_region
          %s936 = sand.u32 %s138, 1
          %s937 = scalar_lea.sflag [#allocation3], %s936
          %s938 = sand.u32 %s138, 1
          %s939 = smul.addr %s938, 112
          %s940 = scalar_lea.vmem [#allocation2], %s939
          %941 = dma.done %s937, 1792
        $region52: #{tpu_custom_call.1} parent=47 // pred_fallthru
          _
      $region48: #{tpu_custom_call.1} parent=5 // pred_fallthru
        _
    $region6: #{tpu_custom_call.1} parent=1 // loop_footer
      %s18 = sadd.s32 1, %s14
    $region7: #{tpu_custom_call.1} parent=1 // loop_footer_branch
      %13 = sbr.rel target = $region3
    $region8: #{tpu_custom_call.1} parent=1 // loop_exit
      _
    %942 = vsyncpa [#allocation3], 1
    %s943 = scalar_lea.sflag [#allocation3], 1
    %944 = vsyncpa %s943, 1

// kernel: tpu_custom_call.1
$region0: #{tpu_custom_call.1}
  #allocation0 [shape = 'u32[]', space=smem, size = 0x4, offset = 0x4, fixed_abs, tag = 'smem constant byte address 0x4 - core index']
  #allocation1 [shape = 'u32[144,128]{1,0:T(1,128)}', space=vmem, size = 0x12000, scoped, tag = 'internal scratch']
  %s0 = inlined_call_operand.vmem [shape: f32[200,96], index: 0, kind: input, shape index: {}]
  %s1 = inlined_call_operand.vmem [shape: bf16[96,256], index: 1, kind: input, shape index: {}]
  %s2 = inlined_call_operand.vmem [shape: f32[1,256], index: 2, kind: input, shape index: {}]
  %s3 = inlined_call_operand.vmem [shape: bf16[256,128], index: 3, kind: input, shape index: {}]
  %s4 = inlined_call_operand.vmem [shape: f32[1,128], index: 4, kind: input, shape index: {}]
  %s5 = inlined_call_operand.hbm [shape: f32[200,128], index: 5, kind: output, shape index: {}]
  %s6 = sld [smem:[#allocation0]]
  $region53: #{tpu_custom_call.1} parent=0
    _
  %s8 = ssub.s32 1, %s6
  %s9 = scalar_select 0, %s8, %s6
  $region1: #{tpu_custom_call.1} parent=0
    #allocation2 [shape = 'u8[114688]{0}', space=vmem, size = 0x1c000, scoped, tag = 'output window, operand 0']
    #allocation3 [shape = 's32[2]{0}', space=sflag, size = 0x8, scoped, tag = 'scoped memory for tpu_custom_call.1']
    %10 = vsyncpa [#allocation3], 0
    %s11 = scalar_lea.sflag [#allocation3], 1
    %12 = vsyncpa %s11, 0
    loop: start=0, step=1, limit=4
    $region2: #{tpu_custom_call.1} parent=1 // loop_pre_header
      _
    $region3: #{tpu_custom_call.1} parent=1 // loop_header
      %s14 = sphi 0, %s18
      %p15 = scmp.ge.s32.totalorder %s14, 4
      %s24 = sphi 0, %s26
      %s27 = sphi 0, %s24
      %s28 = sphi 0, %s27
      %s44 = sphi 0, %s28
      %s48 = sphi 0, %s48
      %s50 = sphi 0, %s48
      %s51 = sphi 0, %s50
      %s65 = sphi 0, %s51
      %s69 = sphi 0, %s69
      %s71 = sphi 0, %s69
      %s72 = sphi 0, %s71
      %s86 = sphi 0, %s72
      %s90 = sphi 0, %s90
      %s92 = sphi 0, %s90
      %s93 = sphi 0, %s92
      %s107 = sphi 0, %s93
      %s111 = sphi 0, %s111
      %s113 = sphi 0, %s111
      %s114 = sphi 0, %s113
      %s128 = sphi 0, %s114
      %s134 = sphi 0, %s136
      %s137 = sphi 0, %s134
      %s138 = sphi 0, %s137
      %s154 = sphi 0, %s138
    $region4: #{tpu_custom_call.1} parent=1 // loop_header_branch
      %17 = sbr.rel (%p15) target = $region8
    $region5: #{tpu_custom_call.1} parent=1 // loop_body
      %s19 = ssub.s32 %s14, 1
      %s20 = ssub.s32 %s14, 2
      %s21 = sadd.s32 %s14, 1
      %s22 = ssub.s32 %s14, %s21
      %p23 = scmp.eq.s32.totalorder %s22, 0
      %s25 = sadd.s32 %s24, 1
      %s26 = scalar_select %p23, %s24, %s25
      %p29 = pneg %p23
      %p30 = scmp.eq.s32.totalorder %s14, 1
      %p31 = por %p29, %p30
      %p32 = scmp.ne.s32.totalorder %s24, %s27
      %p33 = scmp.eq.s32.totalorder %s14, 0
      %p34 = por %p32, %p33
      %p35 = scmp.ne.s32.totalorder %s24, %s27
      %p36 = scmp.eq.s32.totalorder %s19, 1
      %p37 = por %p35, %p36
      %p38 = scmp.ne.s32.totalorder %s27, %s28
      %p39 = scmp.eq.s32.totalorder %s19, 0
      %p40 = por %p38, %p39
      %p41 = scmp.ne.s32.totalorder %s27, %s28
      %p42 = scmp.eq.s32.totalorder %s20, 1
      %p43 = por %p41, %p42
      %p45 = scmp.ne.s32.totalorder %s28, %s44
      %p46 = scmp.eq.s32.totalorder %s20, 0
      %p47 = por %p45, %p46
      %s49 = sadd.s32 %s48, 1
      %p52 = scmp.eq.s32.totalorder %s14, 1
      %p53 = scmp.ne.s32.totalorder %s48, %s50
      %p54 = scmp.eq.s32.totalorder %s14, 0
      %p55 = por %p53, %p54
      %p56 = scmp.ne.s32.totalorder %s48, %s50
      %p57 = scmp.eq.s32.totalorder %s19, 1
      %p58 = por %p56, %p57
      %p59 = scmp.ne.s32.totalorder %s50, %s51
      %p60 = scmp.eq.s32.totalorder %s19, 0
      %p61 = por %p59, %p60
      %p62 = scmp.ne.s32.totalorder %s50, %s51
      %p63 = scmp.eq.s32.totalorder %s20, 1
      %p64 = por %p62, %p63
      %p66 = scmp.ne.s32.totalorder %s51, %s65
      %p67 = scmp.eq.s32.totalorder %s20, 0
      %p68 = por %p66, %p67
      %s70 = sadd.s32 %s69, 1
      %p73 = scmp.eq.s32.totalorder %s14, 1
      %p74 = scmp.ne.s32.totalorder %s69, %s71
      %p75 = scmp.eq.s32.totalorder %s14, 0
      %p76 = por %p74, %p75
      %p77 = scmp.ne.s32.totalorder %s69, %s71
      %p78 = scmp.eq.s32.totalorder %s19, 1
      %p79 = por %p77, %p78
      %p80 = scmp.ne.s32.totalorder %s71, %s72
      %p81 = scmp.eq.s32.totalorder %s19, 0
      %p82 = por %p80, %p81
      %p83 = scmp.ne.s32.totalorder %s71, %s72
      %p84 = scmp.eq.s32.totalorder %s20, 1
      %p85 = por %p83, %p84
      %p87 = scmp.ne.s32.totalorder %s72, %s86
      %p88 = scmp.eq.s32.totalorder %s20, 0
      %p89 = por %p87, %p88
      %s91 = sadd.s32 %s90, 1
      %p94 = scmp.eq.s32.totalorder %s14, 1
      %p95 = scmp.ne.s32.totalorder %s90, %s92
      %p96 = scmp.eq.s32.totalorder %s14, 0
      %p97 = por %p95, %p96
      %p98 = scmp.ne.s32.totalorder %s90, %s92
      %p99 = scmp.eq.s32.totalorder %s19, 1
      %p100 = por %p98, %p99
      %p101 = scmp.ne.s32.totalorder %s92, %s93
      %p102 = scmp.eq.s32.totalorder %s19, 0
      %p103 = por %p101, %p102
      %p104 = scmp.ne.s32.totalorder %s92, %s93
      %p105 = scmp.eq.s32.totalorder %s20, 1
      %p106 = por %p104, %p105
      %p108 = scmp.ne.s32.totalorder %s93, %s107
      %p109 = scmp.eq.s32.totalorder %s20, 0
      %p110 = por %p108, %p109
      %s112 = sadd.s32 %s111, 1
      %p115 = scmp.eq.s32.totalorder %s14, 1
      %p116 = scmp.ne.s32.totalorder %s111, %s113
      %p117 = scmp.eq.s32.totalorder %s14, 0
      %p118 = por %p116, %p117
      %p119 = scmp.ne.s32.totalorder %s111, %s113
      %p120 = scmp.eq.s32.totalorder %s19, 1
      %p121 = por %p119, %p120
      %p122 = scmp.ne.s32.totalorder %s113, %s114
      %p123 = scmp.eq.s32.totalorder %s19, 0
      %p124 = por %p122, %p123
      %p125 = scmp.ne.s32.totalorder %s113, %s114
      %p126 = scmp.eq.s32.totalorder %s20, 1
      %p127 = por %p125, %p126
      %p129 = scmp.ne.s32.totalorder %s114, %s128
      %p130 = scmp.eq.s32.totalorder %s20, 0
      %p131 = por %p129, %p130
      %s132 = ssub.s32 %s14, %s21
      %p133 = scmp.eq.s32.totalorder %s132, 0
      %s135 = sadd.s32 %s134, 1
      %s136 = scalar_select %p133, %s134, %s135
      %p139 = pneg %p133
      %p140 = scmp.eq.s32.totalorder %s14, 1
      %p141 = por %p139, %p140
      %p142 = scmp.ne.s32.totalorder %s134, %s137
      %p143 = scmp.eq.s32.totalorder %s14, 0
      %p144 = por %p142, %p143
      %p145 = scmp.ne.s32.totalorder %s134, %s137
      %p146 = scmp.eq.s32.totalorder %s19, 1
      %p147 = por %p145, %p146
      %p148 = scmp.ne.s32.totalorder %s137, %s138
      %p149 = scmp.eq.s32.totalorder %s19, 0
      %p150 = por %p148, %p149
      %p151 = scmp.ne.s32.totalorder %s137, %s138
      %p152 = scmp.eq.s32.totalorder %s20, 1
      %p153 = por %p151, %p152
      %p155 = scmp.ne.s32.totalorder %s138, %s154
      %p156 = scmp.eq.s32.totalorder %s20, 0
      %p157 = por %p155, %p156
      %p158 = scmp.le.s32.totalorder 1, %s14
      %p159 = scmp.lt.s32.totalorder %s14, 3
      %p160 = pnand %p158, %p159
      %p161 = pneg %p160
      // Predicated region
      $region9: #{tpu_custom_call.1} parent=5 // pred_check
        _
      $region10: #{tpu_custom_call.1} parent=5 // pred_check_branch
        %163 = sbr.rel (%p160) target = $region12
      $region11: #{tpu_custom_call.1} parent=5 // pred_region
        %s164 = ssub.s32 %s14, 1
        // Predicated region
        $region13: #{tpu_custom_call.1} parent=11 // pred_check
          %p165 = pneg %p61
        $region14: #{tpu_custom_call.1} parent=11 // pred_check_branch
          %167 = sbr.rel (%p165) target = $region16
        $region15: #{tpu_custom_call.1} parent=11 // pred_region
          _
        $region16: #{tpu_custom_call.1} parent=11 // pred_fallthru
          _
        // Predicated region
        $region17: #{tpu_custom_call.1} parent=11 // pred_check
          %p168 = pneg %p82
        $region18: #{tpu_custom_call.1} parent=11 // pred_check_branch
          %170 = sbr.rel (%p168) target = $region20
        $region19: #{tpu_custom_call.1} parent=11 // pred_region
          _
        $region20: #{tpu_custom_call.1} parent=11 // pred_fallthru
          _
        // Predicated region
        $region21: #{tpu_custom_call.1} parent=11 // pred_check
          %p171 = pneg %p103
        $region22: #{tpu_custom_call.1} parent=11 // pred_check_branch
          %173 = sbr.rel (%p171) target = $region24
        $region23: #{tpu_custom_call.1} parent=11 // pred_region
          _
        $region24: #{tpu_custom_call.1} parent=11 // pred_fallthru
          _
        // Predicated region
        $region25: #{tpu_custom_call.1} parent=11 // pred_check
          %p174 = pneg %p124
        $region26: #{tpu_custom_call.1} parent=11 // pred_check_branch
          %176 = sbr.rel (%p174) target = $region28
        $region27: #{tpu_custom_call.1} parent=11 // pred_region
          _
        $region28: #{tpu_custom_call.1} parent=11 // pred_fallthru
          _
      $region12: #{tpu_custom_call.1} parent=5 // pred_fallthru
        _
      %p177 = scmp.lt.s32.totalorder %s14, 2
      // Predicated region
      $region29: #{tpu_custom_call.1} parent=5 // pred_check
        %p178 = pneg %p177
      $region30: #{tpu_custom_call.1} parent=5 // pred_check_branch
        %180 = sbr.rel (%p178) target = $region32
      $region31: #{tpu_custom_call.1} parent=5 // pred_region
        // Predicated region
        $region33: #{tpu_custom_call.1} parent=31 // pred_check
          %p181 = pneg %p34
        $region34: #{tpu_custom_call.1} parent=31 // pred_check_branch
          %183 = sbr.rel (%p181) target = $region36
        $region35: #{tpu_custom_call.1} parent=31 // pred_region
          %s184 = smul.u32 14, %s14
          %s185 = ssub.s32 25, %s184
          %p186 = scmp.lt.s32.totalorder %s185, 14
          %s187 = scalar_select %p186, %s185, 14
          %s188 = smul.u32 128, %s187
          %p189 = scmp.lt.s32.totalorder %s184, 24
          %s190 = scalar_select %p189, %s184, 24
          %s191 = smul.addr %s190, 8
          %s192 = scalar_lea.vmem %s0, %s191
          %s193 = smul.u32 14, %s14
          %s194 = ssub.s32 25, %s193
          %p195 = scmp.lt.s32.totalorder %s194, 14
          %s196 = scalar_select %p195, %s194, 14
          %s197 = smul.u32 128, %s196
        $region36: #{tpu_custom_call.1} parent=31 // pred_fallthru
          _
      $region32: #{tpu_custom_call.1} parent=5 // pred_fallthru
        _
      %p198 = scmp.le.s32.totalorder 1, %s14
      %p199 = scmp.lt.s32.totalorder %s14, 3
      %p200 = pnand %p198, %p199
      %p201 = pneg %p200
      // Predicated region
      $region37: #{tpu_custom_call.1} parent=5 // pred_check
        _
      $region38: #{tpu_custom_call.1} parent=5 // pred_check_branch
        %203 = sbr.rel (%p200) target = $region40
      $region39: #{tpu_custom_call.1} parent=5 // pred_region
        %s204 = ssub.s32 %s14, 1
        %s205 = smul.u32 14, %s19
        %s206 = ssub.s32 25, %s205
        %p207 = scmp.lt.s32.totalorder %s206, 14
        %s208 = scalar_select %p207, %s206, 14
        %s209 = smul.u32 128, %s208
        %p210 = scmp.lt.s32.totalorder %s205, 24
        %s211 = scalar_select %p210, %s205, 24
        %s212 = smul.addr %s211, 8
        %s213 = scalar_lea.vmem %s0, %s212
        %p214 = pneg %p40
        %p215 = pneg %p37
        %p216 = pneg %p61
        %p217 = pneg %p58
        %p218 = pneg %p82
        %p219 = pneg %p79
        %p220 = pneg %p103
        %p221 = pneg %p100
        %p222 = pneg %p124
        %p223 = pneg %p121
        %p224 = pneg %p150
        %p225 = pneg %p147
        %s226 = sand.u32 %s137, 1
        %s227 = scalar_lea.sflag [#allocation3], %s226
        %s228 = sand.u32 %s137, 1
        %s229 = smul.addr %s228, 112
        %s230 = scalar_lea.vmem [#allocation2], %s229
        %s231 = smul.u32 14, %s19
        %s232 = ssub.s32 25, %s231
        %p233 = scmp.lt.s32.totalorder %s232, 14
        %s234 = scalar_select %p233, %s232, 14
        %s235 = smul.u32 128, %s234
        %p236 = scmp.lt.s32.totalorder %s231, 24
        %s237 = scalar_select %p236, %s231, 24
        %s238 = smul.addr %s237, 8
        %s239 = scalar_lea.vmem %s0, %s238
        %s240 = smul.u32 14, %s19
        %s241 = ssub.s32 25, %s240
        %p242 = scmp.lt.s32.totalorder %s241, 14
        %s243 = scalar_select %p242, %s241, 14
        %s244 = smul.u32 128, %s243
        %s245 = smul.u32 14, %s19
        %s246 = ssub.s32 25, %s245
        %p247 = scmp.lt.s32.totalorder %s246, 14
        %s248 = scalar_select %p247, %s246, 14
        %s249 = smul.u32 128, %s248
        %v251 = vld [vmem:[%s239] sm:$0xff]
        %v252 = vld [vmem:[%s239 + $0x8] sm:$0xff]
        %v253 = vld [vmem:[%s239 + $0x10] sm:$0xff]
        %v254 = vld [vmem:[%s239 + $0x18] sm:$0xff]
        %v255 = vld [vmem:[%s239 + $0x20] sm:$0xff]
        %v256 = vld [vmem:[%s239 + $0x28] sm:$0xff]
        %v257 = vld [vmem:[%s239 + $0x30] sm:$0xff]
        %v258 = vld [vmem:[%s239 + $0x38] sm:$0xff]
        %v259 = vld [vmem:[%s239 + $0x40] sm:$0xff]
        %v260 = vld [vmem:[%s239 + $0x48] sm:$0xff]
        %v261 = vld [vmem:[%s239 + $0x50] sm:$0xff]
        %v262 = vld [vmem:[%s239 + $0x58] sm:$0xff]
        %v263 = vld [vmem:[%s239 + $0x60] sm:$0xff]
        %v264 = vld [vmem:[%s239 + $0x68] sm:$0xff]
        %v265 = vpack.c.bf16 %v252, %v251
        %v266 = vpack.c.bf16 %v254, %v253
        %v267 = vpack.c.bf16 %v256, %v255
        %v268 = vpack.c.bf16 %v258, %v257
        %v269 = vpack.c.bf16 %v260, %v259
        %v270 = vpack.c.bf16 %v262, %v261
        %v271 = vpack.c.bf16 %v264, %v263
        %v272 = vld [vmem:[%s1] sm:$0xff]
        %v273 = vld [vmem:[%s1 + $0x8] sm:$0xff]
        %v274 = vld [vmem:[%s1 + $0x10] sm:$0xff]
        %v275 = vld [vmem:[%s1 + $0x18] sm:$0xff]
        %v276 = vld [vmem:[%s1 + $0x20] sm:$0xff]
        %v277 = vld [vmem:[%s1 + $0x28] sm:$0xff]
        %v278 = vld [vmem:[%s1 + $0x30] sm:$0xff]
        %v279 = vld [vmem:[%s1 + $0x38] sm:$0xff]
        %v280 = vld [vmem:[%s1 + $0x40] sm:$0xff]
        %v281 = vld [vmem:[%s1 + $0x48] sm:$0xff]
        %v282 = vld [vmem:[%s1 + $0x50] sm:$0xff]
        %v283 = vld [vmem:[%s1 + $0x58] sm:$0xff]
        %v284 = vld [vmem:[%s2] sm:$0x3]
        %v286 = vlaneseq
        %v287 = vshrl.u32 %v286, 7
        %v288 = vsub.s32 0, %v287
        %v289 = vrot.slane %v284, %v288
        %v290 = vlaneseq
        %v291 = vshrl.u32 %v290, 7
        %v292 = vsub.s32 1, %v291
        %v293 = vrot.slane %v284, %v292
        %v308 = vunpack.c.l.b16 %v272
        %v309 = vunpack.c.h.b16 %v272
        %v310 = vunpack.c.l.b16 %v273
        %v311 = vunpack.c.h.b16 %v273
        %v312 = vunpack.c.l.b16 %v274
        %v313 = vunpack.c.h.b16 %v274
        %v314 = vunpack.c.l.b16 %v275
        %v315 = vunpack.c.h.b16 %v275
        %v316 = vunpack.c.l.b16 %v276
        %v317 = vunpack.c.h.b16 %v276
        %v318 = vunpack.c.l.b16 %v277
        %v319 = vunpack.c.h.b16 %v277
        %v320 = vunpack.c.l.b16 %v278
        %v321 = vunpack.c.h.b16 %v278
        %v322 = vunpack.c.l.b16 %v279
        %v323 = vunpack.c.h.b16 %v279
        %v324 = vunpack.c.l.b16 %v280
        %v325 = vunpack.c.h.b16 %v280
        %v326 = vunpack.c.l.b16 %v281
        %v327 = vunpack.c.h.b16 %v281
        %v328 = vunpack.c.l.b16 %v282
        %v329 = vunpack.c.h.b16 %v282
        %v330 = vunpack.c.l.b16 %v283
        %v331 = vunpack.c.h.b16 %v283
        %v332 = vpack.c.b16 %v310, %v308
        %v333 = vpack.c.b16 %v311, %v309
        %v334 = vpack.c.b16 %v314, %v312
        %v335 = vpack.c.b16 %v315, %v313
        %v336 = vpack.c.b16 %v318, %v316
        %v337 = vpack.c.b16 %v319, %v317
        %v338 = vpack.c.b16 %v322, %v320
        %v339 = vpack.c.b16 %v323, %v321
        %v340 = vpack.c.b16 %v326, %v324
        %v341 = vpack.c.b16 %v327, %v325
        %v342 = vpack.c.b16 %v330, %v328
        %v343 = vpack.c.b16 %v331, %v329
        %vm356 = vcmask 785408
        %v358 = vsel %vm356, %v265, 0
        %v361 = vsel %vm356, %v266, 0
        %v364 = vsel %vm356, %v267, 0
        %v367 = vsel %vm356, %v268, 0
        %v370 = vsel %vm356, %v269, 0
        %v373 = vsel %vm356, %v270, 0
        %v376 = vsel %vm356, %v271, 0
        %378 = vmatprep.subr.bf16.mxu0 %v333
        %379 = vmatpush1.bf16.msra.mxu0 %v332
        %380 = vmatprep.subr.bf16.mxu0 %v335
        %381 = vmatpush1.bf16.msra.mxu0 %v334
        %382 = vmatprep.subr.bf16.mxu0 %v337
        %383 = vmatpush1.bf16.msra.mxu0 %v336
        %384 = vmatprep.subr.bf16.mxu0 %v339
        %385 = vmatpush1.bf16.msra.mxu0 %v338
        %386 = vmatprep.subr.bf16.mxu0 %v341
        %387 = vmatpush1.bf16.msra.mxu0 %v340
        %388 = vmatprep.subr.bf16.mxu0 %v343
        %389 = vmatpush1.bf16.msra.mxu0 %v342
        %390 = vmatprep.subr.bf16.mxu0 0
        %391 = vmatpush1.bf16.msra.mxu0 0
        %392 = vmatprep.subr.bf16.mxu0 0
        %393 = vmatpush1.bf16.msra.mxu0 0
        %394 = vmatprep.subr.bf16.mxu0 0
        %395 = vmatpush1.bf16.msra.mxu0 0
        %396 = vmatprep.subr.bf16.mxu0 0
        %397 = vmatpush1.bf16.msra.mxu0 0
        %398 = vmatprep.subr.bf16.mxu0 0
        %399 = vmatpush1.bf16.msra.mxu0 0
        %400 = vmatprep.subr.bf16.mxu0 0
        %401 = vmatpush1.bf16.msra.mxu0 0
        %402 = vmatprep.subr.bf16.mxu0 0
        %403 = vmatpush1.bf16.msra.mxu0 0
        %404 = vmatprep.subr.bf16.mxu0 0
        %405 = vmatpush1.bf16.msra.mxu0 0
        %406 = vmatprep.subr.bf16.mxu0 0
        %407 = vmatpush1.bf16.msra.mxu0 0
        %408 = vmatprep.subr.bf16.mxu0 0
        %409 = vmatpush1.bf16.msra.mxu0 0
        %410 = vmatprep.mubr.bf16.mxu0 0
        %411 = vmatmul.mubr.bf16.gmra.mrb[0].mxu0 %v358
        %v412 = vpop.f32.mrb[0].mxu0
        %v413 = vadd.f32 %v289, %v412
        %v414 = vpop.f32.mrb[0].mxu0
        %v415 = vadd.f32 %v293, %v414
        %v416 = vpop.f32.mrb[0].mxu0
        %v417 = vadd.f32 %v289, %v416
        %v418 = vpop.f32.mrb[0].mxu0
        %v419 = vadd.f32 %v293, %v418
        %420 = vmatprep.mubr.bf16.mxu0 0
        %421 = vmatmul.mubr.bf16.gmra.mrb[0].mxu0 %v361
        %v422 = vpop.f32.mrb[0].mxu0
        %v423 = vadd.f32 %v289, %v422
        %v424 = vpop.f32.mrb[0].mxu0
        %v425 = vadd.f32 %v293, %v424
        %v426 = vpop.f32.mrb[0].mxu0
        %v427 = vadd.f32 %v289, %v426
        %v428 = vpop.f32.mrb[0].mxu0
        %v429 = vadd.f32 %v293, %v428
        %430 = vmatprep.mubr.bf16.mxu0 0
        %431 = vmatmul.mubr.bf16.gmra.mrb[0].mxu0 %v364
        %v432 = vpop.f32.mrb[0].mxu0
        %v433 = vadd.f32 %v289, %v432
        %v434 = vpop.f32.mrb[0].mxu0
        %v435 = vadd.f32 %v293, %v434
        %v436 = vpop.f32.mrb[0].mxu0
        %v437 = vadd.f32 %v289, %v436
        %v438 = vpop.f32.mrb[0].mxu0
        %v439 = vadd.f32 %v293, %v438
        %440 = vmatprep.mubr.bf16.mxu0 0
        %441 = vmatmul.mubr.bf16.gmra.mrb[0].mxu0 %v367
        %v442 = vpop.f32.mrb[0].mxu0
        %v443 = vadd.f32 %v289, %v442
        %v444 = vpop.f32.mrb[0].mxu0
        %v445 = vadd.f32 %v293, %v444
        %v446 = vpop.f32.mrb[0].mxu0
        %v447 = vadd.f32 %v289, %v446
        %v448 = vpop.f32.mrb[0].mxu0
        %v449 = vadd.f32 %v293, %v448
        %450 = vmatprep.mubr.bf16.mxu0 0
        %451 = vmatmul.mubr.bf16.gmra.mrb[0].mxu0 %v370
        %v452 = vpop.f32.mrb[0].mxu0
        %v453 = vadd.f32 %v289, %v452
        %v454 = vpop.f32.mrb[0].mxu0
        %v455 = vadd.f32 %v293, %v454
        %v456 = vpop.f32.mrb[0].mxu0
        %v457 = vadd.f32 %v289, %v456
        %v458 = vpop.f32.mrb[0].mxu0
        %v459 = vadd.f32 %v293, %v458
        %460 = vmatprep.mubr.bf16.mxu0 0
        %461 = vmatmul.mubr.bf16.gmra.mrb[0].mxu0 %v373
        %v462 = vpop.f32.mrb[0].mxu0
        %v463 = vadd.f32 %v289, %v462
        %v464 = vpop.f32.mrb[0].mxu0
        %v465 = vadd.f32 %v293, %v464
        %v466 = vpop.f32.mrb[0].mxu0
        %v467 = vadd.f32 %v289, %v466
        %v468 = vpop.f32.mrb[0].mxu0
        %v469 = vadd.f32 %v293, %v468
        %470 = vmatprep.mubr.bf16.mxu0 0
        %471 = vmatmul.mubr.bf16.gmra.mrb[0].mxu0 %v376
        %v472 = vpop.f32.mrb[0].mxu0
        %v473 = vadd.f32 %v289, %v472
        %v474 = vpop.f32.mrb[0].mxu0
        %v475 = vadd.f32 %v293, %v474
        %v476 = vpop.f32.mrb[0].mxu0
        %v477 = vadd.f32 %v289, %v476
        %v478 = vpop.f32.mrb[0].mxu0
        %v479 = vadd.f32 %v293, %v478
        %480 = vdwg.mxu0
        %v481 = vmax.f32 %v413, 0.0
        %v482 = vmax.f32 %v415, 0.0
        %v483 = vmax.f32 %v417, 0.0
        %v484 = vmax.f32 %v419, 0.0
        %v485 = vmax.f32 %v423, 0.0
        %v486 = vmax.f32 %v425, 0.0
        %v487 = vmax.f32 %v427, 0.0
        %v488 = vmax.f32 %v429, 0.0
        %v489 = vmax.f32 %v433, 0.0
        %v490 = vmax.f32 %v435, 0.0
        %v491 = vmax.f32 %v437, 0.0
        %v492 = vmax.f32 %v439, 0.0
        %v493 = vmax.f32 %v443, 0.0
        %v494 = vmax.f32 %v445, 0.0
        %v495 = vmax.f32 %v447, 0.0
        %v496 = vmax.f32 %v449, 0.0
        %v497 = vmax.f32 %v453, 0.0
        %v498 = vmax.f32 %v455, 0.0
        %v499 = vmax.f32 %v457, 0.0
        %v500 = vmax.f32 %v459, 0.0
        %v501 = vmax.f32 %v463, 0.0
        %v502 = vmax.f32 %v465, 0.0
        %v503 = vmax.f32 %v467, 0.0
        %v504 = vmax.f32 %v469, 0.0
        %v505 = vmax.f32 %v473, 0.0
        %v506 = vmax.f32 %v475, 0.0
        %v507 = vmax.f32 %v477, 0.0
        %v508 = vmax.f32 %v479, 0.0
        %v509 = vpack.c.bf16 %v483, %v481
        %v510 = vpack.c.bf16 %v484, %v482
        %v511 = vpack.c.bf16 %v487, %v485
        %v512 = vpack.c.bf16 %v488, %v486
        %v513 = vpack.c.bf16 %v491, %v489
        %v514 = vpack.c.bf16 %v492, %v490
        %v515 = vpack.c.bf16 %v495, %v493
        %v516 = vpack.c.bf16 %v496, %v494
        %v517 = vpack.c.bf16 %v499, %v497
        %v518 = vpack.c.bf16 %v500, %v498
        %v519 = vpack.c.bf16 %v503, %v501
        %v520 = vpack.c.bf16 %v504, %v502
        %v521 = vpack.c.bf16 %v507, %v505
        %v522 = vpack.c.bf16 %v508, %v506
        %v523 = vld [vmem:[%s3] sm:$0xf]
        %v524 = vld [vmem:[%s3 + $0x4] sm:$0xf]
        %v525 = vld [vmem:[%s3 + $0x8] sm:$0xf]
        %v526 = vld [vmem:[%s3 + $0xc] sm:$0xf]
        %v527 = vld [vmem:[%s3 + $0x10] sm:$0xf]
        %v528 = vld [vmem:[%s3 + $0x14] sm:$0xf]
        %v529 = vld [vmem:[%s3 + $0x18] sm:$0xf]
        %v530 = vld [vmem:[%s3 + $0x1c] sm:$0xf]
        %v531 = vld [vmem:[%s3 + $0x20] sm:$0xf]
        %v532 = vld [vmem:[%s3 + $0x24] sm:$0xf]
        %v533 = vld [vmem:[%s3 + $0x28] sm:$0xf]
        %v534 = vld [vmem:[%s3 + $0x2c] sm:$0xf]
        %v535 = vld [vmem:[%s3 + $0x30] sm:$0xf]
        %v536 = vld [vmem:[%s3 + $0x34] sm:$0xf]
        %v537 = vld [vmem:[%s3 + $0x38] sm:$0xf]
        %v538 = vld [vmem:[%s3 + $0x3c] sm:$0xf]
        %v539 = vld [vmem:[%s3 + $0x40] sm:$0xf]
        %v540 = vld [vmem:[%s3 + $0x44] sm:$0xf]
        %v541 = vld [vmem:[%s3 + $0x48] sm:$0xf]
        %v542 = vld [vmem:[%s3 + $0x4c] sm:$0xf]
        %v543 = vld [vmem:[%s3 + $0x50] sm:$0xf]
        %v544 = vld [vmem:[%s3 + $0x54] sm:$0xf]
        %v545 = vld [vmem:[%s3 + $0x58] sm:$0xf]
        %v546 = vld [vmem:[%s3 + $0x5c] sm:$0xf]
        %v547 = vld [vmem:[%s3 + $0x60] sm:$0xf]
        %v548 = vld [vmem:[%s3 + $0x64] sm:$0xf]
        %v549 = vld [vmem:[%s3 + $0x68] sm:$0xf]
        %v550 = vld [vmem:[%s3 + $0x6c] sm:$0xf]
        %v551 = vld [vmem:[%s3 + $0x70] sm:$0xf]
        %v552 = vld [vmem:[%s3 + $0x74] sm:$0xf]
        %v553 = vld [vmem:[%s3 + $0x78] sm:$0xf]
        %v554 = vld [vmem:[%s3 + $0x7c] sm:$0xf]
        %v555 = vld [vmem:[%s4] sm:$0x1]
        %v557 = vlaneseq
        %v558 = vshrl.u32 %v557, 7
        %v559 = vsub.s32 0, %v558
        %v560 = vrot.slane %v555, %v559
        %v594 = vunpack.c.l.b16 %v523
        %v595 = vunpack.c.l.b16 %v524
        %v596 = vunpack.c.l.b16 %v525
        %v597 = vunpack.c.l.b16 %v526
        %v598 = vunpack.c.l.b16 %v527
        %v599 = vunpack.c.l.b16 %v528
        %v600 = vunpack.c.l.b16 %v529
        %v601 = vunpack.c.l.b16 %v530
        %v602 = vunpack.c.l.b16 %v531
        %v603 = vunpack.c.l.b16 %v532
        %v604 = vunpack.c.l.b16 %v533
        %v605 = vunpack.c.l.b16 %v534
        %v606 = vunpack.c.l.b16 %v535
        %v607 = vunpack.c.l.b16 %v536
        %v608 = vunpack.c.l.b16 %v537
        %v609 = vunpack.c.l.b16 %v538
        %v610 = vunpack.c.l.b16 %v539
        %v611 = vunpack.c.l.b16 %v540
        %v612 = vunpack.c.l.b16 %v541
        %v613 = vunpack.c.l.b16 %v542
        %v614 = vunpack.c.l.b16 %v543
        %v615 = vunpack.c.l.b16 %v544
        %v616 = vunpack.c.l.b16 %v545
        %v617 = vunpack.c.l.b16 %v546
        %v618 = vunpack.c.l.b16 %v547
        %v619 = vunpack.c.l.b16 %v548
        %v620 = vunpack.c.l.b16 %v549
        %v621 = vunpack.c.l.b16 %v550
        %v622 = vunpack.c.l.b16 %v551
        %v623 = vunpack.c.l.b16 %v552
        %v624 = vunpack.c.l.b16 %v553
        %v625 = vunpack.c.l.b16 %v554
        %v626 = vpack.c.b16 %v595, %v594
        %v627 = vpack.c.b16 %v597, %v596
        %v628 = vpack.c.b16 %v599, %v598
        %v629 = vpack.c.b16 %v601, %v600
        %v630 = vpack.c.b16 %v603, %v602
        %v631 = vpack.c.b16 %v605, %v604
        %v632 = vpack.c.b16 %v607, %v606
        %v633 = vpack.c.b16 %v609, %v608
        %v634 = vpack.c.b16 %v611, %v610
        %v635 = vpack.c.b16 %v613, %v612
        %v636 = vpack.c.b16 %v615, %v614
        %v637 = vpack.c.b16 %v617, %v616
        %v638 = vpack.c.b16 %v619, %v618
        %v639 = vpack.c.b16 %v621, %v620
        %v640 = vpack.c.b16 %v623, %v622
        %v641 = vpack.c.b16 %v625, %v624
        %658 = vmatprep.subr.bf16.mxu0 0
        %659 = vmatpush1.bf16.msra.mxu0 %v626
        %660 = vmatprep.subr.bf16.mxu0 0
        %661 = vmatpush1.bf16.msra.mxu0 %v627
        %662 = vmatprep.subr.bf16.mxu0 0
        %663 = vmatpush1.bf16.msra.mxu0 %v628
        %664 = vmatprep.subr.bf16.mxu0 0
        %665 = vmatpush1.bf16.msra.mxu0 %v629
        %666 = vmatprep.subr.bf16.mxu0 0
        %667 = vmatpush1.bf16.msra.mxu0 %v630
        %668 = vmatprep.subr.bf16.mxu0 0
        %669 = vmatpush1.bf16.msra.mxu0 %v631
        %670 = vmatprep.subr.bf16.mxu0 0
        %671 = vmatpush1.bf16.msra.mxu0 %v632
        %672 = vmatprep.subr.bf16.mxu0 0
        %673 = vmatpush1.bf16.msra.mxu0 %v633
        %674 = vmatprep.subr.bf16.mxu0 0
        %675 = vmatpush1.bf16.msra.mxu0 %v634
        %676 = vmatprep.subr.bf16.mxu0 0
        %677 = vmatpush1.bf16.msra.mxu0 %v635
        %678 = vmatprep.subr.bf16.mxu0 0
        %679 = vmatpush1.bf16.msra.mxu0 %v636
        %680 = vmatprep.subr.bf16.mxu0 0
        %681 = vmatpush1.bf16.msra.mxu0 %v637
        %682 = vmatprep.subr.bf16.mxu0 0
        %683 = vmatpush1.bf16.msra.mxu0 %v638
        %684 = vmatprep.subr.bf16.mxu0 0
        %685 = vmatpush1.bf16.msra.mxu0 %v639
        %686 = vmatprep.subr.bf16.mxu0 0
        %687 = vmatpush1.bf16.msra.mxu0 %v640
        %688 = vmatprep.subr.bf16.mxu0 0
        %689 = vmatpush1.bf16.msra.mxu0 %v641
        %690 = vmatprep.mubr.bf16.mxu0 %v510
        %691 = vmatmul.mubr.bf16.gmra.mrb[0].mxu0 %v509
        %v692 = vpop.f32.mrb[0].mxu0
        %v693 = vadd.f32 %v560, %v692
        %v694 = vpop.f32.mrb[0].mxu0
        %v695 = vpop.f32.mrb[0].mxu0
        %v696 = vadd.f32 %v560, %v695
        %v697 = vpop.f32.mrb[0].mxu0
        %698 = vmatprep.mubr.bf16.mxu0 %v512
        %699 = vmatmul.mubr.bf16.gmra.mrb[0].mxu0 %v511
        %v700 = vpop.f32.mrb[0].mxu0
        %v701 = vadd.f32 %v560, %v700
        %v702 = vpop.f32.mrb[0].mxu0
        %v703 = vpop.f32.mrb[0].mxu0
        %v704 = vadd.f32 %v560, %v703
        %v705 = vpop.f32.mrb[0].mxu0
        %706 = vmatprep.mubr.bf16.mxu0 %v514
        %707 = vmatmul.mubr.bf16.gmra.mrb[0].mxu0 %v513
        %v708 = vpop.f32.mrb[0].mxu0
        %v709 = vadd.f32 %v560, %v708
        %v710 = vpop.f32.mrb[0].mxu0
        %v711 = vpop.f32.mrb[0].mxu0
        %v712 = vadd.f32 %v560, %v711
        %v713 = vpop.f32.mrb[0].mxu0
        %714 = vmatprep.mubr.bf16.mxu0 %v516
        %715 = vmatmul.mubr.bf16.gmra.mrb[0].mxu0 %v515
        %v716 = vpop.f32.mrb[0].mxu0
        %v717 = vadd.f32 %v560, %v716
        %v718 = vpop.f32.mrb[0].mxu0
        %v719 = vpop.f32.mrb[0].mxu0
        %v720 = vadd.f32 %v560, %v719
        %v721 = vpop.f32.mrb[0].mxu0
        %722 = vmatprep.mubr.bf16.mxu0 %v518
        %723 = vmatmul.mubr.bf16.gmra.mrb[0].mxu0 %v517
        %v724 = vpop.f32.mrb[0].mxu0
        %v725 = vadd.f32 %v560, %v724
        %v726 = vpop.f32.mrb[0].mxu0
        %v727 = vpop.f32.mrb[0].mxu0
        %v728 = vadd.f32 %v560, %v727
        %v729 = vpop.f32.mrb[0].mxu0
        %730 = vmatprep.mubr.bf16.mxu0 %v520
        %731 = vmatmul.mubr.bf16.gmra.mrb[0].mxu0 %v519
        %v732 = vpop.f32.mrb[0].mxu0
        %v733 = vadd.f32 %v560, %v732
        %v734 = vpop.f32.mrb[0].mxu0
        %v735 = vpop.f32.mrb[0].mxu0
        %v736 = vadd.f32 %v560, %v735
        %v737 = vpop.f32.mrb[0].mxu0
        %738 = vmatprep.mubr.bf16.mxu0 %v522
        %739 = vmatmul.mubr.bf16.gmra.mrb[0].mxu0 %v521
        %v740 = vpop.f32.mrb[0].mxu0
        %v741 = vadd.f32 %v560, %v740
        %v742 = vpop.f32.mrb[0].mxu0
        %v743 = vpop.f32.mrb[0].mxu0
        %v744 = vadd.f32 %v560, %v743
        %v745 = vpop.f32.mrb[0].mxu0
        %746 = vdwg.mxu0
        %747 = vmax.xlane.f32.xlu0 %v693
        %v748 = vpop.xlane.xlu0 %747
        %749 = vmax.xlane.f32.xlu0 %v696
        %v750 = vpop.xlane.xlu0 %749
        %751 = vmax.xlane.f32.xlu0 %v701
        %v752 = vpop.xlane.xlu0 %751
        %753 = vmax.xlane.f32.xlu0 %v704
        %v754 = vpop.xlane.xlu0 %753
        %755 = vmax.xlane.f32.xlu0 %v709
        %v756 = vpop.xlane.xlu0 %755
        %757 = vmax.xlane.f32.xlu0 %v712
        %v758 = vpop.xlane.xlu0 %757
        %759 = vmax.xlane.f32.xlu0 %v717
        %v760 = vpop.xlane.xlu0 %759
        %761 = vmax.xlane.f32.xlu0 %v720
        %v762 = vpop.xlane.xlu0 %761
        %763 = vmax.xlane.f32.xlu0 %v725
        %v764 = vpop.xlane.xlu0 %763
        %765 = vmax.xlane.f32.xlu0 %v728
        %v766 = vpop.xlane.xlu0 %765
        %767 = vmax.xlane.f32.xlu0 %v733
        %v768 = vpop.xlane.xlu0 %767
        %769 = vmax.xlane.f32.xlu0 %v736
        %v770 = vpop.xlane.xlu0 %769
        %771 = vmax.xlane.f32.xlu0 %v741
        %v772 = vpop.xlane.xlu0 %771
        %773 = vmax.xlane.f32.xlu0 %v744
        %v774 = vpop.xlane.xlu0 %773
        %v775 = vsub.f32 %v693, %v748
        %v776 = vsub.f32 %v696, %v750
        %v777 = vsub.f32 %v701, %v752
        %v778 = vsub.f32 %v704, %v754
        %v779 = vsub.f32 %v709, %v756
        %v780 = vsub.f32 %v712, %v758
        %v781 = vsub.f32 %v717, %v760
        %v782 = vsub.f32 %v720, %v762
        %v783 = vsub.f32 %v725, %v764
        %v784 = vsub.f32 %v728, %v766
        %v785 = vsub.f32 %v733, %v768
        %v786 = vsub.f32 %v736, %v770
        %v787 = vsub.f32 %v741, %v772
        %v788 = vsub.f32 %v744, %v774
        %v789 = vmul.f32 %v775, 1.442695
        %v790 = vpow.pop %v789
        %v791 = vmul.f32 %v776, 1.442695
        %v792 = vpow.pop %v791
        %v793 = vmul.f32 %v777, 1.442695
        %v794 = vpow.pop %v793
        %v795 = vmul.f32 %v778, 1.442695
        %v796 = vpow.pop %v795
        %v797 = vmul.f32 %v779, 1.442695
        %v798 = vpow.pop %v797
        %v799 = vmul.f32 %v780, 1.442695
        %v800 = vpow.pop %v799
        %v801 = vmul.f32 %v781, 1.442695
        %v802 = vpow.pop %v801
        %v803 = vmul.f32 %v782, 1.442695
        %v804 = vpow.pop %v803
        %v805 = vmul.f32 %v783, 1.442695
        %v806 = vpow.pop %v805
        %v807 = vmul.f32 %v784, 1.442695
        %v808 = vpow.pop %v807
        %v809 = vmul.f32 %v785, 1.442695
        %v810 = vpow.pop %v809
        %v811 = vmul.f32 %v786, 1.442695
        %v812 = vpow.pop %v811
        %v813 = vmul.f32 %v787, 1.442695
        %v814 = vpow.pop %v813
        %v815 = vmul.f32 %v788, 1.442695
        %v816 = vpow.pop %v815
        %817 = vadd.xlane.f32.xlu0 %v790
        %v818 = vpop.xlane.xlu0 %817
        %819 = vadd.xlane.f32.xlu0 %v792
        %v820 = vpop.xlane.xlu0 %819
        %821 = vadd.xlane.f32.xlu0 %v794
        %v822 = vpop.xlane.xlu0 %821
        %823 = vadd.xlane.f32.xlu0 %v796
        %v824 = vpop.xlane.xlu0 %823
        %825 = vadd.xlane.f32.xlu0 %v798
        %v826 = vpop.xlane.xlu0 %825
        %827 = vadd.xlane.f32.xlu0 %v800
        %v828 = vpop.xlane.xlu0 %827
        %829 = vadd.xlane.f32.xlu0 %v802
        %v830 = vpop.xlane.xlu0 %829
        %831 = vadd.xlane.f32.xlu0 %v804
        %v832 = vpop.xlane.xlu0 %831
        %833 = vadd.xlane.f32.xlu0 %v806
        %v834 = vpop.xlane.xlu0 %833
        %835 = vadd.xlane.f32.xlu0 %v808
        %v836 = vpop.xlane.xlu0 %835
        %837 = vadd.xlane.f32.xlu0 %v810
        %v838 = vpop.xlane.xlu0 %837
        %839 = vadd.xlane.f32.xlu0 %v812
        %v840 = vpop.xlane.xlu0 %839
        %841 = vadd.xlane.f32.xlu0 %v814
        %v842 = vpop.xlane.xlu0 %841
        %843 = vadd.xlane.f32.xlu0 %v816
        %v844 = vpop.xlane.xlu0 %843
        %v845 = vlog2.pop %v818
        %v846 = vmul.f32 %v845, 0.6931472
        %v847 = vlog2.pop %v820
        %v848 = vmul.f32 %v847, 0.6931472
        %v849 = vlog2.pop %v822
        %v850 = vmul.f32 %v849, 0.6931472
        %v851 = vlog2.pop %v824
        %v852 = vmul.f32 %v851, 0.6931472
        %v853 = vlog2.pop %v826
        %v854 = vmul.f32 %v853, 0.6931472
        %v855 = vlog2.pop %v828
        %v856 = vmul.f32 %v855, 0.6931472
        %v857 = vlog2.pop %v830
        %v858 = vmul.f32 %v857, 0.6931472
        %v859 = vlog2.pop %v832
        %v860 = vmul.f32 %v859, 0.6931472
        %v861 = vlog2.pop %v834
        %v862 = vmul.f32 %v861, 0.6931472
        %v863 = vlog2.pop %v836
        %v864 = vmul.f32 %v863, 0.6931472
        %v865 = vlog2.pop %v838
        %v866 = vmul.f32 %v865, 0.6931472
        %v867 = vlog2.pop %v840
        %v868 = vmul.f32 %v867, 0.6931472
        %v869 = vlog2.pop %v842
        %v870 = vmul.f32 %v869, 0.6931472
        %v871 = vlog2.pop %v844
        %v872 = vmul.f32 %v871, 0.6931472
        %v873 = vsub.f32 %v775, %v846
        %v874 = vsub.f32 %v776, %v848
        %v875 = vsub.f32 %v777, %v850
        %v876 = vsub.f32 %v778, %v852
        %v877 = vsub.f32 %v779, %v854
        %v878 = vsub.f32 %v780, %v856
        %v879 = vsub.f32 %v781, %v858
        %v880 = vsub.f32 %v782, %v860
        %v881 = vsub.f32 %v783, %v862
        %v882 = vsub.f32 %v784, %v864
        %v883 = vsub.f32 %v785, %v866
        %v884 = vsub.f32 %v786, %v868
        %v885 = vsub.f32 %v787, %v870
        %v886 = vsub.f32 %v788, %v872
        %887 = vst [vmem:[%s230] sm:$0xff] %v873
        %888 = vst [vmem:[%s230 + $0x8] sm:$0xff] %v874
        %889 = vst [vmem:[%s230 + $0x10] sm:$0xff] %v875
        %890 = vst [vmem:[%s230 + $0x18] sm:$0xff] %v876
        %891 = vst [vmem:[%s230 + $0x20] sm:$0xff] %v877
        %892 = vst [vmem:[%s230 + $0x28] sm:$0xff] %v878
        %893 = vst [vmem:[%s230 + $0x30] sm:$0xff] %v879
        %894 = vst [vmem:[%s230 + $0x38] sm:$0xff] %v880
        %895 = vst [vmem:[%s230 + $0x40] sm:$0xff] %v881
        %896 = vst [vmem:[%s230 + $0x48] sm:$0xff] %v882
        %897 = vst [vmem:[%s230 + $0x50] sm:$0xff] %v883
        %898 = vst [vmem:[%s230 + $0x58] sm:$0xff] %v884
        %899 = vst [vmem:[%s230 + $0x60] sm:$0xff] %v885
        %900 = vst [vmem:[%s230 + $0x68] sm:$0xff] %v886
        %s901 = sand.u32 %s137, 1
        %s902 = scalar_lea.sflag [#allocation3], %s901
        %s903 = sand.u32 %s137, 1
        %s904 = smul.addr %s903, 112
        %s905 = scalar_lea.vmem [#allocation2], %s904
        // Predicated region
        $region41: #{tpu_custom_call.1} parent=39 // pred_check
          %p906 = pneg %p147
        $region42: #{tpu_custom_call.1} parent=39 // pred_check_branch
          %908 = sbr.rel (%p906) target = $region44
        $region43: #{tpu_custom_call.1} parent=39 // pred_region
          %s909 = smul.u32 14, %s19
          %s910 = ssub.s32 25, %s909
          %p911 = scmp.lt.s32.totalorder %s910, 14
          %s912 = scalar_select %p911, %s910, 14
          %s913 = smul.u32 128, %s912
          %s915 = ssub.s32 1792, %s913
          %916 = vsyncadd %s902, %s915
          %p917 = scmp.ne.s32.totalorder 0, %s913
          %s918 = smul.addr %s909, 128
          %s919 = scalar_lea.hbm %s5, %s918
          %s920 = smul.u32 8, %s912
          %s921 = sshll.u32 %s905, 4
          %s922 = int_to_ptr.vmem [resolvable:$true] %s921
          %s923 = sshll.u32 %s920, 4
          %927 = dma.vmem_to_hbm [thread:$0]  (%p917), %s922, %s923, %s919, %s902, 128, 128, 8
        $region44: #{tpu_custom_call.1} parent=39 // pred_fallthru
          _
      $region40: #{tpu_custom_call.1} parent=5 // pred_fallthru
        _
      %p928 = scmp.le.s32.totalorder 2, %s14
      // Predicated region
      $region45: #{tpu_custom_call.1} parent=5 // pred_check
        %p929 = pneg %p928
      $region46: #{tpu_custom_call.1} parent=5 // pred_check_branch
        %931 = sbr.rel (%p929) target = $region48
      $region47: #{tpu_custom_call.1} parent=5 // pred_region
        %s932 = ssub.s32 %s14, 2
        // Predicated region
        $region49: #{tpu_custom_call.1} parent=47 // pred_check
          %p933 = pneg %p153
        $region50: #{tpu_custom_call.1} parent=47 // pred_check_branch
          %935 = sbr.rel (%p933) target = $region52
        $region51: #{tpu_custom_call.1} parent=47 // pred_region
          %s936 = sand.u32 %s138, 1
          %s937 = scalar_lea.sflag [#allocation3], %s936
          %s938 = sand.u32 %s138, 1
          %s939 = smul.addr %s938, 112
          %s940 = scalar_lea.vmem [#allocation2], %s939
          %941 = dma.done %s937, 1792
        $region52: #{tpu_custom_call.1} parent=47 // pred_fallthru
          _
      $region48: #{tpu_custom_call.1} parent=5 // pred_fallthru
        _
    $region6: #{tpu_custom_call.1} parent=1 // loop_footer
      %s18 = sadd.s32 1, %s14
    $region7: #{tpu_custom_call.1} parent=1 // loop_footer_branch
      %13 = sbr.rel target = $region3
    $region8: #{tpu_custom_call.1} parent=1 // loop_exit
      _
    %942 = vsyncpa [#allocation3], 1
    %s943 = scalar_lea.sflag [#allocation3], 1
    %944 = vsyncpa %s943, 1

</llo_original>
